<compile_context>
chip_gen: v7x
topology: tpu7x:2x2x1
jax: 0.10.0
libtpu: 0.0.40
codegen_flags: <defaults>
</compile_context>

<pallas_src>
import jax
import jax.numpy as jnp
from jax import lax
from jax.experimental import pallas as pl
from jax.experimental.pallas import tpu as pltpu


# ----------------------------- Pallas kernels -----------------------------

def _conv_pool_tanh_kernel(p_ref, w_ref, b_ref, o_ref):
    """Fused conv-as-matmul + 2x2 maxpool + bias + tanh.

    p_ref: (4, K, tm) bf16 im2col slabs, one per 2x2-pool offset
    w_ref: (OC, K)    bf16 conv weight as a matrix
    b_ref: (OC, 1)    f32 bias (broadcast over lanes)
    o_ref: (OC, tm)   f32 pooled+tanh output (lane-dense along M)
    """
    w = w_ref[...]
    acc = jnp.dot(w, p_ref[0], preferred_element_type=jnp.float32)
    for d in range(1, 4):
        acc = jnp.maximum(
            acc, jnp.dot(w, p_ref[d], preferred_element_type=jnp.float32))
    o_ref[...] = jnp.tanh(acc + b_ref[...])


def _fc_head_kernel(x_ref, w1_ref, b1_ref, w2_ref, b2_ref, o_ref):
    """fc1 -> tanh -> (Dropout: identity) -> fc2 -> Softmax -> Softmax, fused."""
    h = jnp.tanh(
        jnp.dot(x_ref[...], w1_ref[...], preferred_element_type=jnp.float32)
        + b1_ref[...])
    logits = (jnp.dot(h, w2_ref[...], preferred_element_type=jnp.float32)
              + b2_ref[...])

    # Softmax(dim=1) from nn.Sequential (approx reciprocal -> free EUP slot).
    m1 = jnp.max(logits, axis=-1, keepdims=True)
    e1 = jnp.exp(logits - m1)
    s1 = e1 * pl.reciprocal(jnp.sum(e1, axis=-1, keepdims=True), approx=True)

    # F.softmax(dim=1) applied again in forward(); exact divide so output rows
    # sum to 1 to float32 precision.
    m2 = jnp.max(s1, axis=-1, keepdims=True)
    e2 = jnp.exp(s1 - m2)
    o_ref[...] = e2 / jnp.sum(e2, axis=-1, keepdims=True)


# ------------------------------ wrappers -----------------------------------

def _pick_m_tile(m):
    """Largest 128-multiple tile that divides M exactly, else one full block."""
    for tm in (1024, 512, 256, 128):
        if m % tm == 0 and m > tm:
            return tm
    return m


def conv_pool_tanh(patches4, w_mat, bias_col):
    """patches4: (4, K, M) bf16, w_mat: (OC, K) bf16, bias_col: (OC, 1) f32."""
    _, K, M = patches4.shape
    OC = w_mat.shape[0]
    tm = _pick_m_tile(M)
    return pl.pallas_call(
        _conv_pool_tanh_kernel,
        grid=(M // tm,),
        in_specs=[
            pl.BlockSpec((4, K, tm), lambda i: (0, 0, i)),   # tiled along M
            pl.BlockSpec((OC, K), lambda i: (0, 0)),          # resident weight
            pl.BlockSpec((OC, 1), lambda i: (0, 0)),          # resident bias
        ],
        out_specs=pl.BlockSpec((OC, tm), lambda i: (0, i)),
        out_shape=jax.ShapeDtypeStruct((OC, M), jnp.float32),
        compiler_params=pltpu.CompilerParams(
            dimension_semantics=("parallel",)),
    )(patches4, w_mat, bias_col)


def fc_head(flat, w1, b1, w2, b2):
    """Fused fc1/tanh/fc2/double-softmax.  All operands fit in VMEM whole."""
    N, K1 = flat.shape
    H = w1.shape[1]
    O = w2.shape[1]
    return pl.pallas_call(
        _fc_head_kernel,
        grid=(1,),
        in_specs=[
            pl.BlockSpec((N, K1), lambda i: (0, 0)),
            pl.BlockSpec((K1, H), lambda i: (0, 0)),
            pl.BlockSpec((1, H), lambda i: (0, 0)),
            pl.BlockSpec((H, O), lambda i: (0, 0)),
            pl.BlockSpec((1, O), lambda i: (0, 0)),
        ],
        out_specs=pl.BlockSpec((N, O), lambda i: (0, 0)),
        out_shape=jax.ShapeDtypeStruct((N, O), jnp.float32),
    )(flat, w1, b1, w2, b2)


# ------------------------------ JAX glue -----------------------------------

def _pooled_patches(x_cnhw, k, pool=2):
    """im2col evaluated only at the 2x2-pooled output positions.

    x_cnhw: (C, N, H, W).  Returns (4, C*k*k, N*PH*PW) (same dtype as x) plus
    the pooled spatial dims.  K-order is (c, kh, kw), matching
    conv_weight.reshape(OC, IC*KH*KW); M-order is (n, ph, pw) -> the conv
    kernel's (OC, M) output reshapes straight back to CNHW with no transpose.
    """
    C, N, H, W = x_cnhw.shape
    OH, OW = H - k + 1, W - k + 1
    PH, PW = OH // pool, OW // pool
    slabs = []
    for dh in range(pool):
        for dw in range(pool):
            taps = []
            for kh in range(k):
                for kw in range(k):
                    taps.append(lax.slice(
                        x_cnhw,
                        (0, 0, dh + kh, dw + kw),
                        (C, N,
                         dh + kh + pool * (PH - 1) + 1,
                         dw + kw + pool * (PW - 1) + 1),
                        (1, 1, pool, pool)))               # (C, N, PH, PW)
            slab = jnp.stack(taps, axis=1)                  # (C, k*k, N, PH, PW)
            slabs.append(slab.reshape(C * k * k, N * PH * PW))
    # TODO(synk): build these taps in-kernel (DMA the input tile once, slice in
    # VMEM) to avoid the k*k-fold im2col expansion in HBM at large batch.
    return jnp.stack(slabs, axis=0), PH, PW


def cnn_forward(x_nchw, params):
    N = x_nchw.shape[0]

    # conv1 (k=5) -> MaxPool2d(2) -> Tanh   (single fused kernel)
    x_cnhw = jnp.transpose(x_nchw, (1, 0, 2, 3)).astype(jnp.bfloat16)  # (1,N,28,28)
    p1, ph1, pw1 = _pooled_patches(x_cnhw, 5)                          # (4,25,N*144)
    w1 = params["conv1_w"].reshape(10, -1).astype(jnp.bfloat16)        # (10,25)
    b1 = params["conv1_b"].reshape(10, 1)
    h1 = conv_pool_tanh(p1, w1, b1).reshape(10, N, ph1, pw1)           # CNHW f32

    # conv2 (k=5) -> Dropout2d (identity, inference) -> MaxPool2d(2) -> Tanh
    p2, ph2, pw2 = _pooled_patches(h1.astype(jnp.bfloat16), 5)         # (4,250,N*16)
    w2 = params["conv2_w"].reshape(10, -1).astype(jnp.bfloat16)        # (10,250)
    b2 = params["conv2_b"].reshape(10, 1)
    h2 = conv_pool_tanh(p2, w2, b2).reshape(10, N, ph2, pw2)           # (10,N,4,4)

    # Flatten in PyTorch (C, H, W) order (tiny: 160*N floats).
    flat = jnp.transpose(h2, (1, 0, 2, 3)).reshape(N, -1)              # (N, 160)

    # fc1 -> Tanh -> Dropout (identity) -> fc2 -> Softmax -> Softmax (fused)
    return fc_head(flat,
                   params["fc1_w"].T, params["fc1_b"].reshape(1, -1),
                   params["fc2_w"].T, params["fc2_b"].reshape(1, -1))


def init_params(key):
    ks = jax.random.split(key, 8)

    def rn(k, shape, scale):
        return scale * jax.random.normal(k, shape, jnp.float32)

    return {
        "conv1_w": rn(ks[0], (10, 1, 5, 5), 0.2),
        "conv1_b": rn(ks[1], (10,), 0.1),
        "conv2_w": rn(ks[2], (10, 10, 5, 5), 0.1),
        "conv2_b": rn(ks[3], (10,), 0.1),
        "fc1_w": rn(ks[4], (50, 160), 0.08),
        "fc1_b": rn(ks[5], (50,), 0.1),
        "fc2_w": rn(ks[6], (10, 50), 0.15),
        "fc2_b": rn(ks[7], (10,), 0.1),
    }


if __name__ == "__main__":
    key = jax.random.PRNGKey(0)
    pkey, xkey = jax.random.split(key)
    params = init_params(pkey)

    # input consistent with fc1 in_features=160: (N, 1, 28, 28), N=2
    x = jax.random.normal(xkey, (2, 1, 28, 28), jnp.float32)

    out = jax.jit(cnn_forward)(x, params)
    out = jax.block_until_ready(out)

    assert out.shape == (2, 10), out.shape
    assert bool(jnp.all(jnp.isfinite(out)))
    # rows of a softmax sum to 1
    assert bool(jnp.allclose(jnp.sum(out, axis=1), 1.0, atol=1e-5))
    print("KERNEL_OK")
</pallas_src>

<mosaic_0001>
module attributes {stable_mosaic.version = 11 : i64} {
  func.func @_conv_pool_tanh_kernel(%arg0: i32, %arg1: memref<4x25x288xbf16, #tpu.memory_space<vmem>>, %arg2: memref<10x25xbf16, #tpu.memory_space<vmem>>, %arg3: memref<10x1xf32, #tpu.memory_space<vmem>>, %arg4: memref<10x288xf32, #tpu.memory_space<vmem>>) attributes {dimension_semantics = [#tpu.dimension_semantics<parallel>], iteration_bounds = array<i64: 1>, scalar_prefetch = 0 : i64, scratch_operands = 0 : i64, tpu.core_type = #tpu.core_type<tc>, window_params = [{transform_indices = @transform_0, window_bounds = array<i64: 4, 25, 288>}, {pipeline_mode = #tpu.pipeline_mode<synchronous>, transform_indices = @transform_1, window_bounds = array<i64: 10, 25>}, {pipeline_mode = #tpu.pipeline_mode<synchronous>, transform_indices = @transform_2, window_bounds = array<i64: 10, 1>}, {transform_indices = @transform_3, window_bounds = array<i64: 10, 288>}]} {
    %c0 = arith.constant 0 : index
    %c0_0 = arith.constant 0 : index
    %0 = vector.load %arg2[%c0, %c0_0] : memref<10x25xbf16, #tpu.memory_space<vmem>>, vector<10x25xbf16>
    %c0_1 = arith.constant 0 : index
    %c0_2 = arith.constant 0 : index
    %c0_3 = arith.constant 0 : index
    %1 = vector.load %arg1[%c0_1, %c0_2, %c0_3] : memref<4x25x288xbf16, #tpu.memory_space<vmem>>, vector<1x25x288xbf16>
    %2 = vector.shape_cast %1 : vector<1x25x288xbf16> to vector<25x288xbf16>
    %cst = arith.constant dense<0.000000e+00> : vector<10x288xf32>
    %3 = tpu.matmul %0, %2, %cst {dimension_numbers = #tpu.dot_dimension_numbers<[1], [0], [0], [1], [0, 0, 1, 1], [], []>} : vector<10x25xbf16>, vector<25x288xbf16>, vector<10x288xf32> -> vector<10x288xf32>
    %c1 = arith.constant 1 : index
    %c0_4 = arith.constant 0 : index
    %c0_5 = arith.constant 0 : index
    %4 = vector.load %arg1[%c1, %c0_4, %c0_5] : memref<4x25x288xbf16, #tpu.memory_space<vmem>>, vector<1x25x288xbf16>
    %5 = vector.shape_cast %4 : vector<1x25x288xbf16> to vector<25x288xbf16>
    %cst_6 = arith.constant dense<0.000000e+00> : vector<10x288xf32>
    %6 = tpu.matmul %0, %5, %cst_6 {dimension_numbers = #tpu.dot_dimension_numbers<[1], [0], [0], [1], [0, 0, 1, 1], [], []>} : vector<10x25xbf16>, vector<25x288xbf16>, vector<10x288xf32> -> vector<10x288xf32>
    %7 = arith.maximumf %3, %6 : vector<10x288xf32>
    %c2 = arith.constant 2 : index
    %c0_7 = arith.constant 0 : index
    %c0_8 = arith.constant 0 : index
    %8 = vector.load %arg1[%c2, %c0_7, %c0_8] : memref<4x25x288xbf16, #tpu.memory_space<vmem>>, vector<1x25x288xbf16>
    %9 = vector.shape_cast %8 : vector<1x25x288xbf16> to vector<25x288xbf16>
    %cst_9 = arith.constant dense<0.000000e+00> : vector<10x288xf32>
    %10 = tpu.matmul %0, %9, %cst_9 {dimension_numbers = #tpu.dot_dimension_numbers<[1], [0], [0], [1], [0, 0, 1, 1], [], []>} : vector<10x25xbf16>, vector<25x288xbf16>, vector<10x288xf32> -> vector<10x288xf32>
    %11 = arith.maximumf %7, %10 : vector<10x288xf32>
    %c3 = arith.constant 3 : index
    %c0_10 = arith.constant 0 : index
    %c0_11 = arith.constant 0 : index
    %12 = vector.load %arg1[%c3, %c0_10, %c0_11] : memref<4x25x288xbf16, #tpu.memory_space<vmem>>, vector<1x25x288xbf16>
    %13 = vector.shape_cast %12 : vector<1x25x288xbf16> to vector<25x288xbf16>
    %cst_12 = arith.constant dense<0.000000e+00> : vector<10x288xf32>
    %14 = tpu.matmul %0, %13, %cst_12 {dimension_numbers = #tpu.dot_dimension_numbers<[1], [0], [0], [1], [0, 0, 1, 1], [], []>} : vector<10x25xbf16>, vector<25x288xbf16>, vector<10x288xf32> -> vector<10x288xf32>
    %15 = arith.maximumf %11, %14 : vector<10x288xf32>
    %c0_13 = arith.constant 0 : index
    %c0_14 = arith.constant 0 : index
    %16 = vector.load %arg3[%c0_13, %c0_14] : memref<10x1xf32, #tpu.memory_space<vmem>>, vector<10x1xf32>
    %17 = vector.broadcast %16 : vector<10x1xf32> to vector<10x288xf32>
    %18 = arith.addf %15, %17 : vector<10x288xf32>
    %19 = math.tanh %18 : vector<10x288xf32>
    %c0_15 = arith.constant 0 : index
    %c0_16 = arith.constant 0 : index
    %20 = vector.load %arg4[%c0_15, %c0_16] : memref<10x288xf32, #tpu.memory_space<vmem>>, vector<10x288xf32>
    tpu.vector_store %arg4[%c0_15, %c0_16], %19 {strides = array<i32>} : memref<10x288xf32, #tpu.memory_space<vmem>>, vector<10x288xf32>,
    return
  }
  func.func @transform_0(%arg0: i32) -> (i32, i32, i32) {
    %c0_i32 = arith.constant 0 : i32
    %c0_i32_0 = arith.constant 0 : i32
    %c0_i32_1 = arith.constant 0 : i32
    return %c0_i32, %c0_i32_0, %arg0 : i32, i32, i32
  }
  func.func @transform_1(%arg0: i32) -> (i32, i32) {
    %c0_i32 = arith.constant 0 : i32
    %c0_i32_0 = arith.constant 0 : i32
    %c0_i32_1 = arith.constant 0 : i32
    return %c0_i32, %c0_i32_0 : i32, i32
  }
  func.func @transform_2(%arg0: i32) -> (i32, i32) {
    %c0_i32 = arith.constant 0 : i32
    %c0_i32_0 = arith.constant 0 : i32
    %c0_i32_1 = arith.constant 0 : i32
    return %c0_i32, %c0_i32_0 : i32, i32
  }
  func.func @transform_3(%arg0: i32) -> (i32, i32) {
    %c0_i32 = arith.constant 0 : i32
    %c0_i32_0 = arith.constant 0 : i32
    return %c0_i32, %arg0 : i32, i32
  }
}

module attributes {stable_mosaic.version = 11 : i64} {
  func.func @_conv_pool_tanh_kernel(%arg0: i32, %arg1: memref<4x250x32xbf16, #tpu.memory_space<vmem>>, %arg2: memref<10x250xbf16, #tpu.memory_space<vmem>>, %arg3: memref<10x1xf32, #tpu.memory_space<vmem>>, %arg4: memref<10x32xf32, #tpu.memory_space<vmem>>) attributes {dimension_semantics = [#tpu.dimension_semantics<parallel>], iteration_bounds = array<i64: 1>, scalar_prefetch = 0 : i64, scratch_operands = 0 : i64, tpu.core_type = #tpu.core_type<tc>, window_params = [{transform_indices = @transform_0, window_bounds = array<i64: 4, 250, 32>}, {pipeline_mode = #tpu.pipeline_mode<synchronous>, transform_indices = @transform_1, window_bounds = array<i64: 10, 250>}, {pipeline_mode = #tpu.pipeline_mode<synchronous>, transform_indices = @transform_2, window_bounds = array<i64: 10, 1>}, {transform_indices = @transform_3, window_bounds = array<i64: 10, 32>}]} {
    %c0 = arith.constant 0 : index
    %c0_0 = arith.constant 0 : index
    %0 = vector.load %arg2[%c0, %c0_0] : memref<10x250xbf16, #tpu.memory_space<vmem>>, vector<10x250xbf16>
    %c0_1 = arith.constant 0 : index
    %c0_2 = arith.constant 0 : index
    %c0_3 = arith.constant 0 : index
    %1 = vector.load %arg1[%c0_1, %c0_2, %c0_3] : memref<4x250x32xbf16, #tpu.memory_space<vmem>>, vector<1x250x32xbf16>
    %2 = vector.shape_cast %1 : vector<1x250x32xbf16> to vector<250x32xbf16>
    %cst = arith.constant dense<0.000000e+00> : vector<10x32xf32>
    %3 = tpu.matmul %0, %2, %cst {dimension_numbers = #tpu.dot_dimension_numbers<[1], [0], [0], [1], [0, 0, 1, 1], [], []>} : vector<10x250xbf16>, vector<250x32xbf16>, vector<10x32xf32> -> vector<10x32xf32>
    %c1 = arith.constant 1 : index
    %c0_4 = arith.constant 0 : index
    %c0_5 = arith.constant 0 : index
    %4 = vector.load %arg1[%c1, %c0_4, %c0_5] : memref<4x250x32xbf16, #tpu.memory_space<vmem>>, vector<1x250x32xbf16>
    %5 = vector.shape_cast %4 : vector<1x250x32xbf16> to vector<250x32xbf16>
    %cst_6 = arith.constant dense<0.000000e+00> : vector<10x32xf32>
    %6 = tpu.matmul %0, %5, %cst_6 {dimension_numbers = #tpu.dot_dimension_numbers<[1], [0], [0], [1], [0, 0, 1, 1], [], []>} : vector<10x250xbf16>, vector<250x32xbf16>, vector<10x32xf32> -> vector<10x32xf32>
    %7 = arith.maximumf %3, %6 : vector<10x32xf32>
    %c2 = arith.constant 2 : index
    %c0_7 = arith.constant 0 : index
    %c0_8 = arith.constant 0 : index
    %8 = vector.load %arg1[%c2, %c0_7, %c0_8] : memref<4x250x32xbf16, #tpu.memory_space<vmem>>, vector<1x250x32xbf16>
    %9 = vector.shape_cast %8 : vector<1x250x32xbf16> to vector<250x32xbf16>
    %cst_9 = arith.constant dense<0.000000e+00> : vector<10x32xf32>
    %10 = tpu.matmul %0, %9, %cst_9 {dimension_numbers = #tpu.dot_dimension_numbers<[1], [0], [0], [1], [0, 0, 1, 1], [], []>} : vector<10x250xbf16>, vector<250x32xbf16>, vector<10x32xf32> -> vector<10x32xf32>
    %11 = arith.maximumf %7, %10 : vector<10x32xf32>
    %c3 = arith.constant 3 : index
    %c0_10 = arith.constant 0 : index
    %c0_11 = arith.constant 0 : index
    %12 = vector.load %arg1[%c3, %c0_10, %c0_11] : memref<4x250x32xbf16, #tpu.memory_space<vmem>>, vector<1x250x32xbf16>
    %13 = vector.shape_cast %12 : vector<1x250x32xbf16> to vector<250x32xbf16>
    %cst_12 = arith.constant dense<0.000000e+00> : vector<10x32xf32>
    %14 = tpu.matmul %0, %13, %cst_12 {dimension_numbers = #tpu.dot_dimension_numbers<[1], [0], [0], [1], [0, 0, 1, 1], [], []>} : vector<10x250xbf16>, vector<250x32xbf16>, vector<10x32xf32> -> vector<10x32xf32>
    %15 = arith.maximumf %11, %14 : vector<10x32xf32>
    %c0_13 = arith.constant 0 : index
    %c0_14 = arith.constant 0 : index
    %16 = vector.load %arg3[%c0_13, %c0_14] : memref<10x1xf32, #tpu.memory_space<vmem>>, vector<10x1xf32>
    %17 = vector.broadcast %16 : vector<10x1xf32> to vector<10x32xf32>
    %18 = arith.addf %15, %17 : vector<10x32xf32>
    %19 = math.tanh %18 : vector<10x32xf32>
    %c0_15 = arith.constant 0 : index
    %c0_16 = arith.constant 0 : index
    %20 = vector.load %arg4[%c0_15, %c0_16] : memref<10x32xf32, #tpu.memory_space<vmem>>, vector<10x32xf32>
    tpu.vector_store %arg4[%c0_15, %c0_16], %19 {strides = array<i32>} : memref<10x32xf32, #tpu.memory_space<vmem>>, vector<10x32xf32>,
    return
  }
  func.func @transform_0(%arg0: i32) -> (i32, i32, i32) {
    %c0_i32 = arith.constant 0 : i32
    %c0_i32_0 = arith.constant 0 : i32
    %c0_i32_1 = arith.constant 0 : i32
    return %c0_i32, %c0_i32_0, %arg0 : i32, i32, i32
  }
  func.func @transform_1(%arg0: i32) -> (i32, i32) {
    %c0_i32 = arith.constant 0 : i32
    %c0_i32_0 = arith.constant 0 : i32
    %c0_i32_1 = arith.constant 0 : i32
    return %c0_i32, %c0_i32_0 : i32, i32
  }
  func.func @transform_2(%arg0: i32) -> (i32, i32) {
    %c0_i32 = arith.constant 0 : i32
    %c0_i32_0 = arith.constant 0 : i32
    %c0_i32_1 = arith.constant 0 : i32
    return %c0_i32, %c0_i32_0 : i32, i32
  }
  func.func @transform_3(%arg0: i32) -> (i32, i32) {
    %c0_i32 = arith.constant 0 : i32
    %c0_i32_0 = arith.constant 0 : i32
    return %c0_i32, %arg0 : i32, i32
  }
}

module attributes {stable_mosaic.version = 11 : i64} {
  func.func @_fc_head_kernel(%arg0: i32, %arg1: memref<2x160xf32, #tpu.memory_space<vmem>>, %arg2: memref<160x50xf32, #tpu.memory_space<vmem>>, %arg3: memref<1x50xf32, #tpu.memory_space<vmem>>, %arg4: memref<50x10xf32, #tpu.memory_space<vmem>>, %arg5: memref<1x10xf32, #tpu.memory_space<vmem>>, %arg6: memref<2x10xf32, #tpu.memory_space<vmem>>) attributes {dimension_semantics = [#tpu.dimension_semantics<arbitrary>], iteration_bounds = array<i64: 1>, scalar_prefetch = 0 : i64, scratch_operands = 0 : i64, tpu.core_type = #tpu.core_type<tc>, window_params = [{pipeline_mode = #tpu.pipeline_mode<synchronous>, transform_indices = @transform_0, window_bounds = array<i64: 2, 160>}, {pipeline_mode = #tpu.pipeline_mode<synchronous>, transform_indices = @transform_1, window_bounds = array<i64: 160, 50>}, {pipeline_mode = #tpu.pipeline_mode<synchronous>, transform_indices = @transform_2, window_bounds = array<i64: 1, 50>}, {pipeline_mode = #tpu.pipeline_mode<synchronous>, transform_indices = @transform_3, window_bounds = array<i64: 50, 10>}, {pipeline_mode = #tpu.pipeline_mode<synchronous>, transform_indices = @transform_4, window_bounds = array<i64: 1, 10>}, {pipeline_mode = #tpu.pipeline_mode<synchronous>, transform_indices = @transform_5, window_bounds = array<i64: 2, 10>}]} {
    %c0 = arith.constant 0 : index
    %c0_0 = arith.constant 0 : index
    %0 = vector.load %arg1[%c0, %c0_0] : memref<2x160xf32, #tpu.memory_space<vmem>>, vector<2x160xf32>
    %c0_1 = arith.constant 0 : index
    %c0_2 = arith.constant 0 : index
    %1 = vector.load %arg2[%c0_1, %c0_2] : memref<160x50xf32, #tpu.memory_space<vmem>>, vector<160x50xf32>
    %cst = arith.constant dense<0.000000e+00> : vector<2x50xf32>
    %2 = tpu.matmul %0, %1, %cst {dimension_numbers = #tpu.dot_dimension_numbers<[1], [0], [0], [1], [0, 0, 1, 1], [], []>} : vector<2x160xf32>, vector<160x50xf32>, vector<2x50xf32> -> vector<2x50xf32>
    %c0_3 = arith.constant 0 : index
    %c0_4 = arith.constant 0 : index
    %3 = vector.load %arg3[%c0_3, %c0_4] : memref<1x50xf32, #tpu.memory_space<vmem>>, vector<1x50xf32>
    %4 = vector.broadcast %3 : vector<1x50xf32> to vector<2x50xf32>
    %5 = arith.addf %2, %4 : vector<2x50xf32>
    %6 = math.tanh %5 : vector<2x50xf32>
    %c0_5 = arith.constant 0 : index
    %c0_6 = arith.constant 0 : index
    %7 = vector.load %arg4[%c0_5, %c0_6] : memref<50x10xf32, #tpu.memory_space<vmem>>, vector<50x10xf32>
    %cst_7 = arith.constant dense<0.000000e+00> : vector<2x10xf32>
    %8 = tpu.matmul %6, %7, %cst_7 {dimension_numbers = #tpu.dot_dimension_numbers<[1], [0], [0], [1], [0, 0, 1, 1], [], []>} : vector<2x50xf32>, vector<50x10xf32>, vector<2x10xf32> -> vector<2x10xf32>
    %c0_8 = arith.constant 0 : index
    %c0_9 = arith.constant 0 : index
    %9 = vector.load %arg5[%c0_8, %c0_9] : memref<1x10xf32, #tpu.memory_space<vmem>>, vector<1x10xf32>
    %10 = vector.broadcast %9 : vector<1x10xf32> to vector<2x10xf32>
    %11 = arith.addf %8, %10 : vector<2x10xf32>
    %cst_10 = arith.constant dense<0xFF800000> : vector<2xf32>
    %12 = vector.multi_reduction <maximumf>, %11, %cst_10 [1] : vector<2x10xf32> to vector<2xf32>
    %13 = vector.shape_cast %12 : vector<2xf32> to vector<2x1xf32>
    %14 = vector.broadcast %13 : vector<2x1xf32> to vector<2x10xf32>
    %15 = arith.subf %11, %14 : vector<2x10xf32>
    %16 = math.exp %15 : vector<2x10xf32>
    %cst_11 = arith.constant dense<0.000000e+00> : vector<2xf32>
    %17 = vector.multi_reduction <add>, %16, %cst_11 [1] : vector<2x10xf32> to vector<2xf32>
    %18 = vector.shape_cast %17 : vector<2xf32> to vector<2x1xf32>
    %19 = tpu.reciprocal %18 {approx = true} : vector<2x1xf32> -> vector<2x1xf32>
    %20 = vector.broadcast %19 : vector<2x1xf32> to vector<2x10xf32>
    %21 = arith.mulf %16, %20 : vector<2x10xf32>
    %cst_12 = arith.constant dense<0xFF800000> : vector<2xf32>
    %22 = vector.multi_reduction <maximumf>, %21, %cst_12 [1] : vector<2x10xf32> to vector<2xf32>
    %23 = vector.shape_cast %22 : vector<2xf32> to vector<2x1xf32>
    %24 = vector.broadcast %23 : vector<2x1xf32> to vector<2x10xf32>
    %25 = arith.subf %21, %24 : vector<2x10xf32>
    %26 = math.exp %25 : vector<2x10xf32>
    %cst_13 = arith.constant dense<0.000000e+00> : vector<2xf32>
    %27 = vector.multi_reduction <add>, %26, %cst_13 [1] : vector<2x10xf32> to vector<2xf32>
    %28 = vector.shape_cast %27 : vector<2xf32> to vector<2x1xf32>
    %29 = vector.broadcast %28 : vector<2x1xf32> to vector<2x10xf32>
    %30 = arith.divf %26, %29 : vector<2x10xf32>
    %c0_14 = arith.constant 0 : index
    %c0_15 = arith.constant 0 : index
    %31 = vector.load %arg6[%c0_14, %c0_15] : memref<2x10xf32, #tpu.memory_space<vmem>>, vector<2x10xf32>
    tpu.vector_store %arg6[%c0_14, %c0_15], %30 {strides = array<i32>} : memref<2x10xf32, #tpu.memory_space<vmem>>, vector<2x10xf32>,
    return
  }
  func.func @transform_0(%arg0: i32) -> (i32, i32) {
    %c0_i32 = arith.constant 0 : i32
    %c0_i32_0 = arith.constant 0 : i32
    %c0_i32_1 = arith.constant 0 : i32
    return %c0_i32, %c0_i32_0 : i32, i32
  }
  func.func @transform_1(%arg0: i32) -> (i32, i32) {
    %c0_i32 = arith.constant 0 : i32
    %c0_i32_0 = arith.constant 0 : i32
    %c0_i32_1 = arith.constant 0 : i32
    return %c0_i32, %c0_i32_0 : i32, i32
  }
  func.func @transform_2(%arg0: i32) -> (i32, i32) {
    %c0_i32 = arith.constant 0 : i32
    %c0_i32_0 = arith.constant 0 : i32
    %c0_i32_1 = arith.constant 0 : i32
    return %c0_i32, %c0_i32_0 : i32, i32
  }
  func.func @transform_3(%arg0: i32) -> (i32, i32) {
    %c0_i32 = arith.constant 0 : i32
    %c0_i32_0 = arith.constant 0 : i32
    %c0_i32_1 = arith.constant 0 : i32
    return %c0_i32, %c0_i32_0 : i32, i32
  }
  func.func @transform_4(%arg0: i32) -> (i32, i32) {
    %c0_i32 = arith.constant 0 : i32
    %c0_i32_0 = arith.constant 0 : i32
    %c0_i32_1 = arith.constant 0 : i32
    return %c0_i32, %c0_i32_0 : i32, i32
  }
  func.func @transform_5(%arg0: i32) -> (i32, i32) {
    %c0_i32 = arith.constant 0 : i32
    %c0_i32_0 = arith.constant 0 : i32
    %c0_i32_1 = arith.constant 0 : i32
    return %c0_i32, %c0_i32_0 : i32, i32
  }
}

</mosaic_0001>

<llo_original>
// kernel: cnn_forward.3
$region0: #{cnn_forward.3}
  #allocation0 [shape = 'u32[]', space=smem, size = 0x4, offset = 0x4, fixed_abs, tag = 'smem constant byte address 0x4 - core index']
  #allocation1 [shape = 'u32[144,128]{1,0:T(1,128)}', space=vmem, size = 0x12000, scoped, tag = 'internal scratch']
  %s0 = inlined_call_operand.vmem [shape: bf16[4,25,288], index: 0, kind: input, shape index: {}]
  %s1 = inlined_call_operand.vmem [shape: bf16[10,25], index: 1, kind: input, shape index: {}]
  %s2 = inlined_call_operand.vmem [shape: f32[10,1], index: 2, kind: input, shape index: {}]
  %s3 = inlined_call_operand.vmem [shape: f32[10,288], index: 3, kind: output, shape index: {}]
  %s4 = sld [smem:[#allocation0]]
  $region22: #{cnn_forward.3} parent=0
    _
  %s6 = ssub.s32 1, %s4
  %s7 = scalar_select 0, %s6, %s4
  // Predicated region
  $region2: #{cnn_forward.3} parent=0 // pred_check
    _
  $region3: #{cnn_forward.3} parent=0 // pred_check_branch
    %9 = sbr.rel (0) target = $region5
  $region4: #{cnn_forward.3} parent=0 // pred_region
    _
  $region5: #{cnn_forward.3} parent=0 // pred_fallthru
    _
  // Predicated region
  $region6: #{cnn_forward.3} parent=0 // pred_check
    _
  $region7: #{cnn_forward.3} parent=0 // pred_check_branch
    %11 = sbr.rel (0) target = $region9
  $region8: #{cnn_forward.3} parent=0 // pred_region
    _
  $region9: #{cnn_forward.3} parent=0 // pred_fallthru
    _
  // Predicated region
  $region10: #{cnn_forward.3} parent=0 // pred_check
    _
  $region11: #{cnn_forward.3} parent=0 // pred_check_branch
    %13 = sbr.rel (0) target = $region13
  $region12: #{cnn_forward.3} parent=0 // pred_region
    _
  $region13: #{cnn_forward.3} parent=0 // pred_fallthru
    _
  %v15 = vld [vmem:[%s1] sm:$0xf]
  %v16 = vld [vmem:[%s1 + $0x4] sm:$0x1]
  %v17 = vld [vmem:[%s0] sm:$0xff]
  %v18 = vld [vmem:[%s0 + $0x8] sm:$0xf]
  %v19 = vld [vmem:[%s0 + $0xc] sm:$0xff]
  %v20 = vld [vmem:[%s0 + $0x14] sm:$0xf]
  %v21 = vld [vmem:[%s0 + $0x18] sm:$0xff]
  %v22 = vld [vmem:[%s0 + $0x20] sm:$0xf]
  %v23 = vld [vmem:[%s0 + $0x24] sm:$0x11]
  %v24 = vld [vmem:[%s0 + $0x2c] sm:$0x1]
  %v27 = vunpack.c.l.b16 %v15
  %v28 = vunpack.c.l.b16 %v16
  %v29 = vpack.c.b16 %v28, %v27
  %v38 = vunpack.c.l.b16 %v17
  %v39 = vunpack.c.h.b16 %v17
  %v40 = vunpack.c.l.b16 %v18
  %v41 = vunpack.c.l.b16 %v19
  %v42 = vunpack.c.h.b16 %v19
  %v43 = vunpack.c.l.b16 %v20
  %v44 = vunpack.c.l.b16 %v21
  %v45 = vunpack.c.h.b16 %v21
  %v46 = vunpack.c.l.b16 %v22
  %v47 = vunpack.c.l.b16 %v23
  %v48 = vunpack.c.h.b16 %v23
  %v49 = vunpack.c.l.b16 %v24
  %v50 = vpack.c.b16 %v41, %v38
  %v51 = vpack.c.b16 %v42, %v39
  %v52 = vpack.c.b16 %v43, %v40
  %v53 = vpack.c.b16 %v47, %v44
  %v54 = vpack.c.b16 %v48, %v45
  %v55 = vpack.c.b16 %v49, %v46
  %vm59 = vcmask 203776
  %v61 = vsel %vm59, %v29, 0
  %vm63 = vcmask 1043456
  %vm64 = vcmask 1044480
  %v65 = vsel %vm63, 4294967295, 65535
  %v66 = vsel %vm64, %v65, 0
  %v68 = vand.u32 %v53, %v66
  %v71 = vand.u32 %v54, %v66
  %v74 = vand.u32 %v55, %v66
  %76 = vmatprep.subr.bf16.mxu0 %v51
  %77 = vmatpush1.bf16.msra.mxu0 %v50
  %78 = vmatprep.subr.bf16.mxu0 %v71
  %79 = vmatpush1.bf16.msra.mxu0 %v68
  %80 = vmatprep.subr.bf16.mxu0 0
  %81 = vmatpush1.bf16.msra.mxu0 0
  %82 = vmatprep.subr.bf16.mxu0 0
  %83 = vmatpush1.bf16.msra.mxu0 0
  %84 = vmatprep.subr.bf16.mxu0 0
  %85 = vmatpush1.bf16.msra.mxu0 0
  %86 = vmatprep.subr.bf16.mxu0 0
  %87 = vmatpush1.bf16.msra.mxu0 0
  %88 = vmatprep.subr.bf16.mxu0 0
  %89 = vmatpush1.bf16.msra.mxu0 0
  %90 = vmatprep.subr.bf16.mxu0 0
  %91 = vmatpush1.bf16.msra.mxu0 0
  %92 = vmatprep.subr.bf16.mxu0 0
  %93 = vmatpush1.bf16.msra.mxu0 0
  %94 = vmatprep.subr.bf16.mxu0 0
  %95 = vmatpush1.bf16.msra.mxu0 0
  %96 = vmatprep.subr.bf16.mxu0 0
  %97 = vmatpush1.bf16.msra.mxu0 0
  %98 = vmatprep.subr.bf16.mxu0 0
  %99 = vmatpush1.bf16.msra.mxu0 0
  %100 = vmatprep.subr.bf16.mxu0 0
  %101 = vmatpush1.bf16.msra.mxu0 0
  %102 = vmatprep.subr.bf16.mxu0 0
  %103 = vmatpush1.bf16.msra.mxu0 0
  %104 = vmatprep.subr.bf16.mxu0 0
  %105 = vmatpush1.bf16.msra.mxu0 0
  %106 = vmatprep.subr.bf16.mxu0 0
  %107 = vmatpush1.bf16.msra.mxu0 0
  %108 = vmatprep.mubr.bf16.mxu0 0
  %109 = vmatmul.mubr.bf16.gmra.mrb[0].mxu0 %v61
  %v110 = vpop.f32.mrb[0].mxu0
  %v111 = vadd.f32 0.0, %v110
  %v112 = vpop.f32.mrb[0].mxu0
  %v113 = vadd.f32 0.0, %v112
  %v114 = vpop.f32.mrb[0].mxu0
  %v115 = vadd.f32 0.0, %v114
  %v116 = vpop.f32.mrb[0].mxu0
  %v117 = vadd.f32 0.0, %v116
  %118 = vdwg.mxu0
  %119 = vmatprep.subr.bf16.mxu0 0
  %120 = vmatpush1.bf16.msra.mxu0 %v52
  %121 = vmatprep.subr.bf16.mxu0 0
  %122 = vmatpush1.bf16.msra.mxu0 %v74
  %123 = vmatprep.subr.bf16.mxu0 0
  %124 = vmatpush1.bf16.msra.mxu0 0
  %125 = vmatprep.subr.bf16.mxu0 0
  %126 = vmatpush1.bf16.msra.mxu0 0
  %127 = vmatprep.subr.bf16.mxu0 0
  %128 = vmatpush1.bf16.msra.mxu0 0
  %129 = vmatprep.subr.bf16.mxu0 0
  %130 = vmatpush1.bf16.msra.mxu0 0
  %131 = vmatprep.subr.bf16.mxu0 0
  %132 = vmatpush1.bf16.msra.mxu0 0
  %133 = vmatprep.subr.bf16.mxu0 0
  %134 = vmatpush1.bf16.msra.mxu0 0
  %135 = vmatprep.subr.bf16.mxu0 0
  %136 = vmatpush1.bf16.msra.mxu0 0
  %137 = vmatprep.subr.bf16.mxu0 0
  %138 = vmatpush1.bf16.msra.mxu0 0
  %139 = vmatprep.subr.bf16.mxu0 0
  %140 = vmatpush1.bf16.msra.mxu0 0
  %141 = vmatprep.subr.bf16.mxu0 0
  %142 = vmatpush1.bf16.msra.mxu0 0
  %143 = vmatprep.subr.bf16.mxu0 0
  %144 = vmatpush1.bf16.msra.mxu0 0
  %145 = vmatprep.subr.bf16.mxu0 0
  %146 = vmatpush1.bf16.msra.mxu0 0
  %147 = vmatprep.subr.bf16.mxu0 0
  %148 = vmatpush1.bf16.msra.mxu0 0
  %149 = vmatprep.subr.bf16.mxu0 0
  %150 = vmatpush1.bf16.msra.mxu0 0
  %151 = vmatprep.mubr.bf16.mxu0 0
  %152 = vmatmul.mubr.bf16.gmra.mrb[0].mxu0 %v61
  %v153 = vpop.f32.mrb[0].mxu0
  %v154 = vadd.f32 0.0, %v153
  %v155 = vpop.f32.mrb[0].mxu0
  %v156 = vpop.f32.mrb[0].mxu0
  %v157 = vadd.f32 0.0, %v156
  %v158 = vpop.f32.mrb[0].mxu0
  %159 = vdwg.mxu0
  %s160 = scalar_lea.vmem %s0, 48
  %v161 = vld [vmem:[%s160] sm:$0xff]
  %v162 = vld [vmem:[%s160 + $0x8] sm:$0xf]
  %v163 = vld [vmem:[%s160 + $0xc] sm:$0xff]
  %v164 = vld [vmem:[%s160 + $0x14] sm:$0xf]
  %v165 = vld [vmem:[%s160 + $0x18] sm:$0xff]
  %v166 = vld [vmem:[%s160 + $0x20] sm:$0xf]
  %v167 = vld [vmem:[%s160 + $0x24] sm:$0x11]
  %v168 = vld [vmem:[%s160 + $0x2c] sm:$0x1]
  %v177 = vunpack.c.l.b16 %v161
  %v178 = vunpack.c.h.b16 %v161
  %v179 = vunpack.c.l.b16 %v162
  %v180 = vunpack.c.l.b16 %v163
  %v181 = vunpack.c.h.b16 %v163
  %v182 = vunpack.c.l.b16 %v164
  %v183 = vunpack.c.l.b16 %v165
  %v184 = vunpack.c.h.b16 %v165
  %v185 = vunpack.c.l.b16 %v166
  %v186 = vunpack.c.l.b16 %v167
  %v187 = vunpack.c.h.b16 %v167
  %v188 = vunpack.c.l.b16 %v168
  %v189 = vpack.c.b16 %v180, %v177
  %v190 = vpack.c.b16 %v181, %v178
  %v191 = vpack.c.b16 %v182, %v179
  %v192 = vpack.c.b16 %v186, %v183
  %v193 = vpack.c.b16 %v187, %v184
  %v194 = vpack.c.b16 %v188, %v185
  %v199 = vand.u32 %v192, %v66
  %v202 = vand.u32 %v193, %v66
  %v205 = vand.u32 %v194, %v66
  %207 = vmatprep.subr.bf16.mxu0 %v190
  %208 = vmatpush1.bf16.msra.mxu0 %v189
  %209 = vmatprep.subr.bf16.mxu0 %v202
  %210 = vmatpush1.bf16.msra.mxu0 %v199
  %211 = vmatprep.subr.bf16.mxu0 0
  %212 = vmatpush1.bf16.msra.mxu0 0
  %213 = vmatprep.subr.bf16.mxu0 0
  %214 = vmatpush1.bf16.msra.mxu0 0
  %215 = vmatprep.subr.bf16.mxu0 0
  %216 = vmatpush1.bf16.msra.mxu0 0
  %217 = vmatprep.subr.bf16.mxu0 0
  %218 = vmatpush1.bf16.msra.mxu0 0
  %219 = vmatprep.subr.bf16.mxu0 0
  %220 = vmatpush1.bf16.msra.mxu0 0
  %221 = vmatprep.subr.bf16.mxu0 0
  %222 = vmatpush1.bf16.msra.mxu0 0
  %223 = vmatprep.subr.bf16.mxu0 0
  %224 = vmatpush1.bf16.msra.mxu0 0
  %225 = vmatprep.subr.bf16.mxu0 0
  %226 = vmatpush1.bf16.msra.mxu0 0
  %227 = vmatprep.subr.bf16.mxu0 0
  %228 = vmatpush1.bf16.msra.mxu0 0
  %229 = vmatprep.subr.bf16.mxu0 0
  %230 = vmatpush1.bf16.msra.mxu0 0
  %231 = vmatprep.subr.bf16.mxu0 0
  %232 = vmatpush1.bf16.msra.mxu0 0
  %233 = vmatprep.subr.bf16.mxu0 0
  %234 = vmatpush1.bf16.msra.mxu0 0
  %235 = vmatprep.subr.bf16.mxu0 0
  %236 = vmatpush1.bf16.msra.mxu0 0
  %237 = vmatprep.subr.bf16.mxu0 0
  %238 = vmatpush1.bf16.msra.mxu0 0
  %239 = vmatprep.mubr.bf16.mxu0 0
  %240 = vmatmul.mubr.bf16.gmra.mrb[0].mxu0 %v61
  %v241 = vpop.f32.mrb[0].mxu0
  %v242 = vadd.f32 0.0, %v241
  %v243 = vpop.f32.mrb[0].mxu0
  %v244 = vadd.f32 0.0, %v243
  %v245 = vpop.f32.mrb[0].mxu0
  %v246 = vadd.f32 0.0, %v245
  %v247 = vpop.f32.mrb[0].mxu0
  %v248 = vadd.f32 0.0, %v247
  %249 = vdwg.mxu0
  %250 = vmatprep.subr.bf16.mxu0 0
  %251 = vmatpush1.bf16.msra.mxu0 %v191
  %252 = vmatprep.subr.bf16.mxu0 0
  %253 = vmatpush1.bf16.msra.mxu0 %v205
  %254 = vmatprep.subr.bf16.mxu0 0
  %255 = vmatpush1.bf16.msra.mxu0 0
  %256 = vmatprep.subr.bf16.mxu0 0
  %257 = vmatpush1.bf16.msra.mxu0 0
  %258 = vmatprep.subr.bf16.mxu0 0
  %259 = vmatpush1.bf16.msra.mxu0 0
  %260 = vmatprep.subr.bf16.mxu0 0
  %261 = vmatpush1.bf16.msra.mxu0 0
  %262 = vmatprep.subr.bf16.mxu0 0
  %263 = vmatpush1.bf16.msra.mxu0 0
  %264 = vmatprep.subr.bf16.mxu0 0
  %265 = vmatpush1.bf16.msra.mxu0 0
  %266 = vmatprep.subr.bf16.mxu0 0
  %267 = vmatpush1.bf16.msra.mxu0 0
  %268 = vmatprep.subr.bf16.mxu0 0
  %269 = vmatpush1.bf16.msra.mxu0 0
  %270 = vmatprep.subr.bf16.mxu0 0
  %271 = vmatpush1.bf16.msra.mxu0 0
  %272 = vmatprep.subr.bf16.mxu0 0
  %273 = vmatpush1.bf16.msra.mxu0 0
  %274 = vmatprep.subr.bf16.mxu0 0
  %275 = vmatpush1.bf16.msra.mxu0 0
  %276 = vmatprep.subr.bf16.mxu0 0
  %277 = vmatpush1.bf16.msra.mxu0 0
  %278 = vmatprep.subr.bf16.mxu0 0
  %279 = vmatpush1.bf16.msra.mxu0 0
  %280 = vmatprep.subr.bf16.mxu0 0
  %281 = vmatpush1.bf16.msra.mxu0 0
  %282 = vmatprep.mubr.bf16.mxu0 0
  %283 = vmatmul.mubr.bf16.gmra.mrb[0].mxu0 %v61
  %v284 = vpop.f32.mrb[0].mxu0
  %v285 = vadd.f32 0.0, %v284
  %v286 = vpop.f32.mrb[0].mxu0
  %v287 = vpop.f32.mrb[0].mxu0
  %v288 = vadd.f32 0.0, %v287
  %v289 = vpop.f32.mrb[0].mxu0
  %290 = vdwg.mxu0
  %v291 = vmax.f32 %v111, %v242
  %v292 = vmax.f32 %v113, %v244
  %v293 = vmax.f32 %v154, %v285
  %v294 = vmax.f32 %v115, %v246
  %v295 = vmax.f32 %v117, %v248
  %v296 = vmax.f32 %v157, %v288
  %s297 = scalar_lea.vmem %s0, 96
  %v298 = vld [vmem:[%s297] sm:$0xff]
  %v299 = vld [vmem:[%s297 + $0x8] sm:$0xf]
  %v300 = vld [vmem:[%s297 + $0xc] sm:$0xff]
  %v301 = vld [vmem:[%s297 + $0x14] sm:$0xf]
  %v302 = vld [vmem:[%s297 + $0x18] sm:$0xff]
  %v303 = vld [vmem:[%s297 + $0x20] sm:$0xf]
  %v304 = vld [vmem:[%s297 + $0x24] sm:$0x11]
  %v305 = vld [vmem:[%s297 + $0x2c] sm:$0x1]
  %v314 = vunpack.c.l.b16 %v298
  %v315 = vunpack.c.h.b16 %v298
  %v316 = vunpack.c.l.b16 %v299
  %v317 = vunpack.c.l.b16 %v300
  %v318 = vunpack.c.h.b16 %v300
  %v319 = vunpack.c.l.b16 %v301
  %v320 = vunpack.c.l.b16 %v302
  %v321 = vunpack.c.h.b16 %v302
  %v322 = vunpack.c.l.b16 %v303
  %v323 = vunpack.c.l.b16 %v304
  %v324 = vunpack.c.h.b16 %v304
  %v325 = vunpack.c.l.b16 %v305
  %v326 = vpack.c.b16 %v317, %v314
  %v327 = vpack.c.b16 %v318, %v315
  %v328 = vpack.c.b16 %v319, %v316
  %v329 = vpack.c.b16 %v323, %v320
  %v330 = vpack.c.b16 %v324, %v321
  %v331 = vpack.c.b16 %v325, %v322
  %v336 = vand.u32 %v329, %v66
  %v339 = vand.u32 %v330, %v66
  %v342 = vand.u32 %v331, %v66
  %344 = vmatprep.subr.bf16.mxu0 %v327
  %345 = vmatpush1.bf16.msra.mxu0 %v326
  %346 = vmatprep.subr.bf16.mxu0 %v339
  %347 = vmatpush1.bf16.msra.mxu0 %v336
  %348 = vmatprep.subr.bf16.mxu0 0
  %349 = vmatpush1.bf16.msra.mxu0 0
  %350 = vmatprep.subr.bf16.mxu0 0
  %351 = vmatpush1.bf16.msra.mxu0 0
  %352 = vmatprep.subr.bf16.mxu0 0
  %353 = vmatpush1.bf16.msra.mxu0 0
  %354 = vmatprep.subr.bf16.mxu0 0
  %355 = vmatpush1.bf16.msra.mxu0 0
  %356 = vmatprep.subr.bf16.mxu0 0
  %357 = vmatpush1.bf16.msra.mxu0 0
  %358 = vmatprep.subr.bf16.mxu0 0
  %359 = vmatpush1.bf16.msra.mxu0 0
  %360 = vmatprep.subr.bf16.mxu0 0
  %361 = vmatpush1.bf16.msra.mxu0 0
  %362 = vmatprep.subr.bf16.mxu0 0
  %363 = vmatpush1.bf16.msra.mxu0 0
  %364 = vmatprep.subr.bf16.mxu0 0
  %365 = vmatpush1.bf16.msra.mxu0 0
  %366 = vmatprep.subr.bf16.mxu0 0
  %367 = vmatpush1.bf16.msra.mxu0 0
  %368 = vmatprep.subr.bf16.mxu0 0
  %369 = vmatpush1.bf16.msra.mxu0 0
  %370 = vmatprep.subr.bf16.mxu0 0
  %371 = vmatpush1.bf16.msra.mxu0 0
  %372 = vmatprep.subr.bf16.mxu0 0
  %373 = vmatpush1.bf16.msra.mxu0 0
  %374 = vmatprep.subr.bf16.mxu0 0
  %375 = vmatpush1.bf16.msra.mxu0 0
  %376 = vmatprep.mubr.bf16.mxu0 0
  %377 = vmatmul.mubr.bf16.gmra.mrb[0].mxu0 %v61
  %v378 = vpop.f32.mrb[0].mxu0
  %v379 = vadd.f32 0.0, %v378
  %v380 = vpop.f32.mrb[0].mxu0
  %v381 = vadd.f32 0.0, %v380
  %v382 = vpop.f32.mrb[0].mxu0
  %v383 = vadd.f32 0.0, %v382
  %v384 = vpop.f32.mrb[0].mxu0
  %v385 = vadd.f32 0.0, %v384
  %386 = vdwg.mxu0
  %387 = vmatprep.subr.bf16.mxu0 0
  %388 = vmatpush1.bf16.msra.mxu0 %v328
  %389 = vmatprep.subr.bf16.mxu0 0
  %390 = vmatpush1.bf16.msra.mxu0 %v342
  %391 = vmatprep.subr.bf16.mxu0 0
  %392 = vmatpush1.bf16.msra.mxu0 0
  %393 = vmatprep.subr.bf16.mxu0 0
  %394 = vmatpush1.bf16.msra.mxu0 0
  %395 = vmatprep.subr.bf16.mxu0 0
  %396 = vmatpush1.bf16.msra.mxu0 0
  %397 = vmatprep.subr.bf16.mxu0 0
  %398 = vmatpush1.bf16.msra.mxu0 0
  %399 = vmatprep.subr.bf16.mxu0 0
  %400 = vmatpush1.bf16.msra.mxu0 0
  %401 = vmatprep.subr.bf16.mxu0 0
  %402 = vmatpush1.bf16.msra.mxu0 0
  %403 = vmatprep.subr.bf16.mxu0 0
  %404 = vmatpush1.bf16.msra.mxu0 0
  %405 = vmatprep.subr.bf16.mxu0 0
  %406 = vmatpush1.bf16.msra.mxu0 0
  %407 = vmatprep.subr.bf16.mxu0 0
  %408 = vmatpush1.bf16.msra.mxu0 0
  %409 = vmatprep.subr.bf16.mxu0 0
  %410 = vmatpush1.bf16.msra.mxu0 0
  %411 = vmatprep.subr.bf16.mxu0 0
  %412 = vmatpush1.bf16.msra.mxu0 0
  %413 = vmatprep.subr.bf16.mxu0 0
  %414 = vmatpush1.bf16.msra.mxu0 0
  %415 = vmatprep.subr.bf16.mxu0 0
  %416 = vmatpush1.bf16.msra.mxu0 0
  %417 = vmatprep.subr.bf16.mxu0 0
  %418 = vmatpush1.bf16.msra.mxu0 0
  %419 = vmatprep.mubr.bf16.mxu0 0
  %420 = vmatmul.mubr.bf16.gmra.mrb[0].mxu0 %v61
  %v421 = vpop.f32.mrb[0].mxu0
  %v422 = vadd.f32 0.0, %v421
  %v423 = vpop.f32.mrb[0].mxu0
  %v424 = vpop.f32.mrb[0].mxu0
  %v425 = vadd.f32 0.0, %v424
  %v426 = vpop.f32.mrb[0].mxu0
  %427 = vdwg.mxu0
  %v428 = vmax.f32 %v291, %v379
  %v429 = vmax.f32 %v292, %v381
  %v430 = vmax.f32 %v293, %v422
  %v431 = vmax.f32 %v294, %v383
  %v432 = vmax.f32 %v295, %v385
  %v433 = vmax.f32 %v296, %v425
  %s434 = scalar_lea.vmem %s0, 144
  %v435 = vld [vmem:[%s434] sm:$0xff]
  %v436 = vld [vmem:[%s434 + $0x8] sm:$0xf]
  %v437 = vld [vmem:[%s434 + $0xc] sm:$0xff]
  %v438 = vld [vmem:[%s434 + $0x14] sm:$0xf]
  %v439 = vld [vmem:[%s434 + $0x18] sm:$0xff]
  %v440 = vld [vmem:[%s434 + $0x20] sm:$0xf]
  %v441 = vld [vmem:[%s434 + $0x24] sm:$0x11]
  %v442 = vld [vmem:[%s434 + $0x2c] sm:$0x1]
  %v451 = vunpack.c.l.b16 %v435
  %v452 = vunpack.c.h.b16 %v435
  %v453 = vunpack.c.l.b16 %v436
  %v454 = vunpack.c.l.b16 %v437
  %v455 = vunpack.c.h.b16 %v437
  %v456 = vunpack.c.l.b16 %v438
  %v457 = vunpack.c.l.b16 %v439
  %v458 = vunpack.c.h.b16 %v439
  %v459 = vunpack.c.l.b16 %v440
  %v460 = vunpack.c.l.b16 %v441
  %v461 = vunpack.c.h.b16 %v441
  %v462 = vunpack.c.l.b16 %v442
  %v463 = vpack.c.b16 %v454, %v451
  %v464 = vpack.c.b16 %v455, %v452
  %v465 = vpack.c.b16 %v456, %v453
  %v466 = vpack.c.b16 %v460, %v457
  %v467 = vpack.c.b16 %v461, %v458
  %v468 = vpack.c.b16 %v462, %v459
  %v473 = vand.u32 %v466, %v66
  %v476 = vand.u32 %v467, %v66
  %v479 = vand.u32 %v468, %v66
  %481 = vmatprep.subr.bf16.mxu0 %v464
  %482 = vmatpush1.bf16.msra.mxu0 %v463
  %483 = vmatprep.subr.bf16.mxu0 %v476
  %484 = vmatpush1.bf16.msra.mxu0 %v473
  %485 = vmatprep.subr.bf16.mxu0 0
  %486 = vmatpush1.bf16.msra.mxu0 0
  %487 = vmatprep.subr.bf16.mxu0 0
  %488 = vmatpush1.bf16.msra.mxu0 0
  %489 = vmatprep.subr.bf16.mxu0 0
  %490 = vmatpush1.bf16.msra.mxu0 0
  %491 = vmatprep.subr.bf16.mxu0 0
  %492 = vmatpush1.bf16.msra.mxu0 0
  %493 = vmatprep.subr.bf16.mxu0 0
  %494 = vmatpush1.bf16.msra.mxu0 0
  %495 = vmatprep.subr.bf16.mxu0 0
  %496 = vmatpush1.bf16.msra.mxu0 0
  %497 = vmatprep.subr.bf16.mxu0 0
  %498 = vmatpush1.bf16.msra.mxu0 0
  %499 = vmatprep.subr.bf16.mxu0 0
  %500 = vmatpush1.bf16.msra.mxu0 0
  %501 = vmatprep.subr.bf16.mxu0 0
  %502 = vmatpush1.bf16.msra.mxu0 0
  %503 = vmatprep.subr.bf16.mxu0 0
  %504 = vmatpush1.bf16.msra.mxu0 0
  %505 = vmatprep.subr.bf16.mxu0 0
  %506 = vmatpush1.bf16.msra.mxu0 0
  %507 = vmatprep.subr.bf16.mxu0 0
  %508 = vmatpush1.bf16.msra.mxu0 0
  %509 = vmatprep.subr.bf16.mxu0 0
  %510 = vmatpush1.bf16.msra.mxu0 0
  %511 = vmatprep.subr.bf16.mxu0 0
  %512 = vmatpush1.bf16.msra.mxu0 0
  %513 = vmatprep.mubr.bf16.mxu0 0
  %514 = vmatmul.mubr.bf16.gmra.mrb[0].mxu0 %v61
  %v515 = vpop.f32.mrb[0].mxu0
  %v516 = vadd.f32 0.0, %v515
  %v517 = vpop.f32.mrb[0].mxu0
  %v518 = vadd.f32 0.0, %v517
  %v519 = vpop.f32.mrb[0].mxu0
  %v520 = vadd.f32 0.0, %v519
  %v521 = vpop.f32.mrb[0].mxu0
  %v522 = vadd.f32 0.0, %v521
  %523 = vdwg.mxu0
  %524 = vmatprep.subr.bf16.mxu0 0
  %525 = vmatpush1.bf16.msra.mxu0 %v465
  %526 = vmatprep.subr.bf16.mxu0 0
  %527 = vmatpush1.bf16.msra.mxu0 %v479
  %528 = vmatprep.subr.bf16.mxu0 0
  %529 = vmatpush1.bf16.msra.mxu0 0
  %530 = vmatprep.subr.bf16.mxu0 0
  %531 = vmatpush1.bf16.msra.mxu0 0
  %532 = vmatprep.subr.bf16.mxu0 0
  %533 = vmatpush1.bf16.msra.mxu0 0
  %534 = vmatprep.subr.bf16.mxu0 0
  %535 = vmatpush1.bf16.msra.mxu0 0
  %536 = vmatprep.subr.bf16.mxu0 0
  %537 = vmatpush1.bf16.msra.mxu0 0
  %538 = vmatprep.subr.bf16.mxu0 0
  %539 = vmatpush1.bf16.msra.mxu0 0
  %540 = vmatprep.subr.bf16.mxu0 0
  %541 = vmatpush1.bf16.msra.mxu0 0
  %542 = vmatprep.subr.bf16.mxu0 0
  %543 = vmatpush1.bf16.msra.mxu0 0
  %544 = vmatprep.subr.bf16.mxu0 0
  %545 = vmatpush1.bf16.msra.mxu0 0
  %546 = vmatprep.subr.bf16.mxu0 0
  %547 = vmatpush1.bf16.msra.mxu0 0
  %548 = vmatprep.subr.bf16.mxu0 0
  %549 = vmatpush1.bf16.msra.mxu0 0
  %550 = vmatprep.subr.bf16.mxu0 0
  %551 = vmatpush1.bf16.msra.mxu0 0
  %552 = vmatprep.subr.bf16.mxu0 0
  %553 = vmatpush1.bf16.msra.mxu0 0
  %554 = vmatprep.subr.bf16.mxu0 0
  %555 = vmatpush1.bf16.msra.mxu0 0
  %556 = vmatprep.mubr.bf16.mxu0 0
  %557 = vmatmul.mubr.bf16.gmra.mrb[0].mxu0 %v61
  %v558 = vpop.f32.mrb[0].mxu0
  %v559 = vadd.f32 0.0, %v558
  %v560 = vpop.f32.mrb[0].mxu0
  %v561 = vpop.f32.mrb[0].mxu0
  %v562 = vadd.f32 0.0, %v561
  %v563 = vpop.f32.mrb[0].mxu0
  %564 = vdwg.mxu0
  %v565 = vmax.f32 %v428, %v516
  %v566 = vmax.f32 %v429, %v518
  %v567 = vmax.f32 %v430, %v559
  %v568 = vmax.f32 %v431, %v520
  %v569 = vmax.f32 %v432, %v522
  %v570 = vmax.f32 %v433, %v562
  %v571 = vld [vmem:[%s2] sm:$0xff]
  %v572 = vld [vmem:[%s2 + $0x8] sm:$0x3]
  %574 = vset.pattern.permute.xlu0 0
  %575 = vperm.xlu0 %574, %v571
  %v576 = vpop.permute.xlu0 %575
  %579 = vset.pattern.permute.xlu0 0
  %580 = vperm.xlu0 %579, %v572
  %v581 = vpop.permute.xlu0 %580
  %v583 = vadd.f32 %v565, %v576
  %v584 = vadd.f32 %v566, %v576
  %v585 = vadd.f32 %v567, %v576
  %v586 = vadd.f32 %v568, %v581
  %v587 = vadd.f32 %v569, %v581
  %v588 = vadd.f32 %v570, %v581
  %v589 = vtanh.pop %v583
  %v590 = vtanh.pop %v584
  %v591 = vtanh.pop %v585
  %v592 = vtanh.pop %v586
  %v593 = vtanh.pop %v587
  %v594 = vtanh.pop %v588
  %595 = vst [vmem:[%s3] sm:$0xff] %v589
  %596 = vst [vmem:[%s3 + $0x8] sm:$0xff] %v590
  %vm597 = vcmask 261120
  %598 = vst.msk [vmem:[%s3 + $0x10] sm:$0xff] %vm597, %v591
  %599 = vst [vmem:[%s3 + $0x18] sm:$0x3] %v592
  %600 = vst [vmem:[%s3 + $0x20] sm:$0x3] %v593
  %vm601 = vcmask 254976
  %602 = vst.msk [vmem:[%s3 + $0x28] sm:$0x3] %vm601, %v594
  // Predicated region
  $region14: #{cnn_forward.3} parent=0 // pred_check
    _
  $region15: #{cnn_forward.3} parent=0 // pred_check_branch
    %604 = sbr.rel (0) target = $region17
  $region16: #{cnn_forward.3} parent=0 // pred_region
    _
  $region17: #{cnn_forward.3} parent=0 // pred_fallthru
    _
  // Predicated region
  $region18: #{cnn_forward.3} parent=0 // pred_check
    _
  $region19: #{cnn_forward.3} parent=0 // pred_check_branch
    %606 = sbr.rel (0) target = $region21
  $region20: #{cnn_forward.3} parent=0 // pred_region
    _
  $region21: #{cnn_forward.3} parent=0 // pred_fallthru
    _

// kernel: cnn_forward.4
$region0: #{cnn_forward.4}
  #allocation0 [shape = 'u32[]', space=smem, size = 0x4, offset = 0x4, fixed_abs, tag = 'smem constant byte address 0x4 - core index']
  #allocation1 [shape = 'u32[144,128]{1,0:T(1,128)}', space=vmem, size = 0x12000, scoped, tag = 'internal scratch']
  %s0 = inlined_call_operand.vmem [shape: bf16[4,250,32], index: 0, kind: input, shape index: {}]
  %s1 = inlined_call_operand.vmem [shape: bf16[10,250], index: 1, kind: input, shape index: {}]
  %s2 = inlined_call_operand.vmem [shape: f32[10,1], index: 2, kind: input, shape index: {}]
  %s3 = inlined_call_operand.vmem [shape: f32[10,32], index: 3, kind: output, shape index: {}]
  %s4 = sld [smem:[#allocation0]]
  $region22: #{cnn_forward.4} parent=0
    _
  %s6 = ssub.s32 1, %s4
  %s7 = scalar_select 0, %s6, %s4
  // Predicated region
  $region2: #{cnn_forward.4} parent=0 // pred_check
    _
  $region3: #{cnn_forward.4} parent=0 // pred_check_branch
    %9 = sbr.rel (0) target = $region5
  $region4: #{cnn_forward.4} parent=0 // pred_region
    _
  $region5: #{cnn_forward.4} parent=0 // pred_fallthru
    _
  // Predicated region
  $region6: #{cnn_forward.4} parent=0 // pred_check
    _
  $region7: #{cnn_forward.4} parent=0 // pred_check_branch
    %11 = sbr.rel (0) target = $region9
  $region8: #{cnn_forward.4} parent=0 // pred_region
    _
  $region9: #{cnn_forward.4} parent=0 // pred_fallthru
    _
  // Predicated region
  $region10: #{cnn_forward.4} parent=0 // pred_check
    _
  $region11: #{cnn_forward.4} parent=0 // pred_check_branch
    %13 = sbr.rel (0) target = $region13
  $region12: #{cnn_forward.4} parent=0 // pred_region
    _
  $region13: #{cnn_forward.4} parent=0 // pred_fallthru
    _
  %v15 = vld [vmem:[%s1] sm:$0xff]
  %v16 = vld [vmem:[%s1 + $0x8] sm:$0x11]
  %v17 = vld [vmem:[%s0] sm:$0xf]
  %v18 = vld [vmem:[%s0 + $0x4] sm:$0xf]
  %v19 = vld [vmem:[%s0 + $0x8] sm:$0xf]
  %v20 = vld [vmem:[%s0 + $0xc] sm:$0xf]
  %v21 = vld [vmem:[%s0 + $0x10] sm:$0xf]
  %v22 = vld [vmem:[%s0 + $0x14] sm:$0xf]
  %v23 = vld [vmem:[%s0 + $0x18] sm:$0xf]
  %v24 = vld [vmem:[%s0 + $0x1c] sm:$0xf]
  %v25 = vld [vmem:[%s0 + $0x20] sm:$0xf]
  %v26 = vld [vmem:[%s0 + $0x24] sm:$0xf]
  %v27 = vld [vmem:[%s0 + $0x28] sm:$0xf]
  %v28 = vld [vmem:[%s0 + $0x2c] sm:$0xf]
  %v29 = vld [vmem:[%s0 + $0x30] sm:$0xf]
  %v30 = vld [vmem:[%s0 + $0x34] sm:$0xf]
  %v31 = vld [vmem:[%s0 + $0x38] sm:$0xf]
  %v32 = vld [vmem:[%s0 + $0x3c] sm:$0xf]
  %v33 = vld [vmem:[%s0 + $0x40] sm:$0xf]
  %v34 = vld [vmem:[%s0 + $0x44] sm:$0xf]
  %v35 = vld [vmem:[%s0 + $0x48] sm:$0xf]
  %v36 = vld [vmem:[%s0 + $0x4c] sm:$0xf]
  %v37 = vld [vmem:[%s0 + $0x50] sm:$0xf]
  %v38 = vld [vmem:[%s0 + $0x54] sm:$0xf]
  %v39 = vld [vmem:[%s0 + $0x58] sm:$0xf]
  %v40 = vld [vmem:[%s0 + $0x5c] sm:$0xf]
  %v41 = vld [vmem:[%s0 + $0x60] sm:$0xf]
  %v42 = vld [vmem:[%s0 + $0x64] sm:$0xf]
  %v43 = vld [vmem:[%s0 + $0x68] sm:$0xf]
  %v44 = vld [vmem:[%s0 + $0x6c] sm:$0xf]
  %v45 = vld [vmem:[%s0 + $0x70] sm:$0xf]
  %v46 = vld [vmem:[%s0 + $0x74] sm:$0xf]
  %v47 = vld [vmem:[%s0 + $0x78] sm:$0xf]
  %v48 = vld [vmem:[%s0 + $0x7c] sm:$0x1]
  %v51 = vunpack.c.l.b16 %v15
  %v52 = vunpack.c.h.b16 %v15
  %v53 = vunpack.c.l.b16 %v16
  %v54 = vunpack.c.h.b16 %v16
  %v55 = vpack.c.b16 %v53, %v51
  %v56 = vpack.c.b16 %v54, %v52
  %v90 = vunpack.c.l.b16 %v17
  %v91 = vunpack.c.l.b16 %v18
  %v92 = vunpack.c.l.b16 %v19
  %v93 = vunpack.c.l.b16 %v20
  %v94 = vunpack.c.l.b16 %v21
  %v95 = vunpack.c.l.b16 %v22
  %v96 = vunpack.c.l.b16 %v23
  %v97 = vunpack.c.l.b16 %v24
  %v98 = vunpack.c.l.b16 %v25
  %v99 = vunpack.c.l.b16 %v26
  %v100 = vunpack.c.l.b16 %v27
  %v101 = vunpack.c.l.b16 %v28
  %v102 = vunpack.c.l.b16 %v29
  %v103 = vunpack.c.l.b16 %v30
  %v104 = vunpack.c.l.b16 %v31
  %v105 = vunpack.c.l.b16 %v32
  %v106 = vunpack.c.l.b16 %v33
  %v107 = vunpack.c.l.b16 %v34
  %v108 = vunpack.c.l.b16 %v35
  %v109 = vunpack.c.l.b16 %v36
  %v110 = vunpack.c.l.b16 %v37
  %v111 = vunpack.c.l.b16 %v38
  %v112 = vunpack.c.l.b16 %v39
  %v113 = vunpack.c.l.b16 %v40
  %v114 = vunpack.c.l.b16 %v41
  %v115 = vunpack.c.l.b16 %v42
  %v116 = vunpack.c.l.b16 %v43
  %v117 = vunpack.c.l.b16 %v44
  %v118 = vunpack.c.l.b16 %v45
  %v119 = vunpack.c.l.b16 %v46
  %v120 = vunpack.c.l.b16 %v47
  %v121 = vunpack.c.l.b16 %v48
  %v122 = vpack.c.b16 %v91, %v90
  %v123 = vpack.c.b16 %v93, %v92
  %v124 = vpack.c.b16 %v95, %v94
  %v125 = vpack.c.b16 %v97, %v96
  %v126 = vpack.c.b16 %v99, %v98
  %v127 = vpack.c.b16 %v101, %v100
  %v128 = vpack.c.b16 %v103, %v102
  %v129 = vpack.c.b16 %v105, %v104
  %v130 = vpack.c.b16 %v107, %v106
  %v131 = vpack.c.b16 %v109, %v108
  %v132 = vpack.c.b16 %v111, %v110
  %v133 = vpack.c.b16 %v113, %v112
  %v134 = vpack.c.b16 %v115, %v114
  %v135 = vpack.c.b16 %v117, %v116
  %v136 = vpack.c.b16 %v119, %v118
  %v137 = vpack.c.b16 %v121, %v120
  %vm153 = vcmask 998400
  %v155 = vsel %vm153, %v56, 0
  %vm157 = vcmask 1044480
  %v159 = vsel %vm157, %v137, 0
  %161 = vmatprep.subr.bf16.mxu0 0
  %162 = vmatpush1.bf16.msra.mxu0 %v122
  %163 = vmatprep.subr.bf16.mxu0 0
  %164 = vmatpush1.bf16.msra.mxu0 %v123
  %165 = vmatprep.subr.bf16.mxu0 0
  %166 = vmatpush1.bf16.msra.mxu0 %v124
  %167 = vmatprep.subr.bf16.mxu0 0
  %168 = vmatpush1.bf16.msra.mxu0 %v125
  %169 = vmatprep.subr.bf16.mxu0 0
  %170 = vmatpush1.bf16.msra.mxu0 %v126
  %171 = vmatprep.subr.bf16.mxu0 0
  %172 = vmatpush1.bf16.msra.mxu0 %v127
  %173 = vmatprep.subr.bf16.mxu0 0
  %174 = vmatpush1.bf16.msra.mxu0 %v128
  %175 = vmatprep.subr.bf16.mxu0 0
  %176 = vmatpush1.bf16.msra.mxu0 %v129
  %177 = vmatprep.subr.bf16.mxu0 0
  %178 = vmatpush1.bf16.msra.mxu0 %v130
  %179 = vmatprep.subr.bf16.mxu0 0
  %180 = vmatpush1.bf16.msra.mxu0 %v131
  %181 = vmatprep.subr.bf16.mxu0 0
  %182 = vmatpush1.bf16.msra.mxu0 %v132
  %183 = vmatprep.subr.bf16.mxu0 0
  %184 = vmatpush1.bf16.msra.mxu0 %v133
  %185 = vmatprep.subr.bf16.mxu0 0
  %186 = vmatpush1.bf16.msra.mxu0 %v134
  %187 = vmatprep.subr.bf16.mxu0 0
  %188 = vmatpush1.bf16.msra.mxu0 %v135
  %189 = vmatprep.subr.bf16.mxu0 0
  %190 = vmatpush1.bf16.msra.mxu0 %v136
  %191 = vmatprep.subr.bf16.mxu0 0
  %192 = vmatpush1.bf16.msra.mxu0 %v159
  %193 = vmatprep.mubr.bf16.mxu0 %v155
  %194 = vmatmul.mubr.bf16.gmra.mrb[0].mxu0 %v55
  %v195 = vpop.f32.mrb[0].mxu0
  %v196 = vadd.f32 0.0, %v195
  %v197 = vpop.f32.mrb[0].mxu0
  %v198 = vpop.f32.mrb[0].mxu0
  %v199 = vadd.f32 0.0, %v198
  %v200 = vpop.f32.mrb[0].mxu0
  %201 = vdwg.mxu0
  %s202 = scalar_lea.vmem %s0, 128
  %v203 = vld [vmem:[%s202] sm:$0xf]
  %v204 = vld [vmem:[%s202 + $0x4] sm:$0xf]
  %v205 = vld [vmem:[%s202 + $0x8] sm:$0xf]
  %v206 = vld [vmem:[%s202 + $0xc] sm:$0xf]
  %v207 = vld [vmem:[%s202 + $0x10] sm:$0xf]
  %v208 = vld [vmem:[%s202 + $0x14] sm:$0xf]
  %v209 = vld [vmem:[%s202 + $0x18] sm:$0xf]
  %v210 = vld [vmem:[%s202 + $0x1c] sm:$0xf]
  %v211 = vld [vmem:[%s202 + $0x20] sm:$0xf]
  %v212 = vld [vmem:[%s202 + $0x24] sm:$0xf]
  %v213 = vld [vmem:[%s202 + $0x28] sm:$0xf]
  %v214 = vld [vmem:[%s202 + $0x2c] sm:$0xf]
  %v215 = vld [vmem:[%s202 + $0x30] sm:$0xf]
  %v216 = vld [vmem:[%s202 + $0x34] sm:$0xf]
  %v217 = vld [vmem:[%s202 + $0x38] sm:$0xf]
  %v218 = vld [vmem:[%s202 + $0x3c] sm:$0xf]
  %v219 = vld [vmem:[%s202 + $0x40] sm:$0xf]
  %v220 = vld [vmem:[%s202 + $0x44] sm:$0xf]
  %v221 = vld [vmem:[%s202 + $0x48] sm:$0xf]
  %v222 = vld [vmem:[%s202 + $0x4c] sm:$0xf]
  %v223 = vld [vmem:[%s202 + $0x50] sm:$0xf]
  %v224 = vld [vmem:[%s202 + $0x54] sm:$0xf]
  %v225 = vld [vmem:[%s202 + $0x58] sm:$0xf]
  %v226 = vld [vmem:[%s202 + $0x5c] sm:$0xf]
  %v227 = vld [vmem:[%s202 + $0x60] sm:$0xf]
  %v228 = vld [vmem:[%s202 + $0x64] sm:$0xf]
  %v229 = vld [vmem:[%s202 + $0x68] sm:$0xf]
  %v230 = vld [vmem:[%s202 + $0x6c] sm:$0xf]
  %v231 = vld [vmem:[%s202 + $0x70] sm:$0xf]
  %v232 = vld [vmem:[%s202 + $0x74] sm:$0xf]
  %v233 = vld [vmem:[%s202 + $0x78] sm:$0xf]
  %v234 = vld [vmem:[%s202 + $0x7c] sm:$0x1]
  %v267 = vunpack.c.l.b16 %v203
  %v268 = vunpack.c.l.b16 %v204
  %v269 = vunpack.c.l.b16 %v205
  %v270 = vunpack.c.l.b16 %v206
  %v271 = vunpack.c.l.b16 %v207
  %v272 = vunpack.c.l.b16 %v208
  %v273 = vunpack.c.l.b16 %v209
  %v274 = vunpack.c.l.b16 %v210
  %v275 = vunpack.c.l.b16 %v211
  %v276 = vunpack.c.l.b16 %v212
  %v277 = vunpack.c.l.b16 %v213
  %v278 = vunpack.c.l.b16 %v214
  %v279 = vunpack.c.l.b16 %v215
  %v280 = vunpack.c.l.b16 %v216
  %v281 = vunpack.c.l.b16 %v217
  %v282 = vunpack.c.l.b16 %v218
  %v283 = vunpack.c.l.b16 %v219
  %v284 = vunpack.c.l.b16 %v220
  %v285 = vunpack.c.l.b16 %v221
  %v286 = vunpack.c.l.b16 %v222
  %v287 = vunpack.c.l.b16 %v223
  %v288 = vunpack.c.l.b16 %v224
  %v289 = vunpack.c.l.b16 %v225
  %v290 = vunpack.c.l.b16 %v226
  %v291 = vunpack.c.l.b16 %v227
  %v292 = vunpack.c.l.b16 %v228
  %v293 = vunpack.c.l.b16 %v229
  %v294 = vunpack.c.l.b16 %v230
  %v295 = vunpack.c.l.b16 %v231
  %v296 = vunpack.c.l.b16 %v232
  %v297 = vunpack.c.l.b16 %v233
  %v298 = vunpack.c.l.b16 %v234
  %v299 = vpack.c.b16 %v268, %v267
  %v300 = vpack.c.b16 %v270, %v269
  %v301 = vpack.c.b16 %v272, %v271
  %v302 = vpack.c.b16 %v274, %v273
  %v303 = vpack.c.b16 %v276, %v275
  %v304 = vpack.c.b16 %v278, %v277
  %v305 = vpack.c.b16 %v280, %v279
  %v306 = vpack.c.b16 %v282, %v281
  %v307 = vpack.c.b16 %v284, %v283
  %v308 = vpack.c.b16 %v286, %v285
  %v309 = vpack.c.b16 %v288, %v287
  %v310 = vpack.c.b16 %v290, %v289
  %v311 = vpack.c.b16 %v292, %v291
  %v312 = vpack.c.b16 %v294, %v293
  %v313 = vpack.c.b16 %v296, %v295
  %v314 = vpack.c.b16 %v298, %v297
  %v331 = vsel %vm157, %v314, 0
  %333 = vmatprep.subr.bf16.mxu0 0
  %334 = vmatpush1.bf16.msra.mxu0 %v299
  %335 = vmatprep.subr.bf16.mxu0 0
  %336 = vmatpush1.bf16.msra.mxu0 %v300
  %337 = vmatprep.subr.bf16.mxu0 0
  %338 = vmatpush1.bf16.msra.mxu0 %v301
  %339 = vmatprep.subr.bf16.mxu0 0
  %340 = vmatpush1.bf16.msra.mxu0 %v302
  %341 = vmatprep.subr.bf16.mxu0 0
  %342 = vmatpush1.bf16.msra.mxu0 %v303
  %343 = vmatprep.subr.bf16.mxu0 0
  %344 = vmatpush1.bf16.msra.mxu0 %v304
  %345 = vmatprep.subr.bf16.mxu0 0
  %346 = vmatpush1.bf16.msra.mxu0 %v305
  %347 = vmatprep.subr.bf16.mxu0 0
  %348 = vmatpush1.bf16.msra.mxu0 %v306
  %349 = vmatprep.subr.bf16.mxu0 0
  %350 = vmatpush1.bf16.msra.mxu0 %v307
  %351 = vmatprep.subr.bf16.mxu0 0
  %352 = vmatpush1.bf16.msra.mxu0 %v308
  %353 = vmatprep.subr.bf16.mxu0 0
  %354 = vmatpush1.bf16.msra.mxu0 %v309
  %355 = vmatprep.subr.bf16.mxu0 0
  %356 = vmatpush1.bf16.msra.mxu0 %v310
  %357 = vmatprep.subr.bf16.mxu0 0
  %358 = vmatpush1.bf16.msra.mxu0 %v311
  %359 = vmatprep.subr.bf16.mxu0 0
  %360 = vmatpush1.bf16.msra.mxu0 %v312
  %361 = vmatprep.subr.bf16.mxu0 0
  %362 = vmatpush1.bf16.msra.mxu0 %v313
  %363 = vmatprep.subr.bf16.mxu0 0
  %364 = vmatpush1.bf16.msra.mxu0 %v331
  %365 = vmatprep.mubr.bf16.mxu0 %v155
  %366 = vmatmul.mubr.bf16.gmra.mrb[0].mxu0 %v55
  %v367 = vpop.f32.mrb[0].mxu0
  %v368 = vadd.f32 0.0, %v367
  %v369 = vpop.f32.mrb[0].mxu0
  %v370 = vpop.f32.mrb[0].mxu0
  %v371 = vadd.f32 0.0, %v370
  %v372 = vpop.f32.mrb[0].mxu0
  %373 = vdwg.mxu0
  %v374 = vmax.f32 %v196, %v368
  %v375 = vmax.f32 %v199, %v371
  %s376 = scalar_lea.vmem %s0, 256
  %v377 = vld [vmem:[%s376] sm:$0xf]
  %v378 = vld [vmem:[%s376 + $0x4] sm:$0xf]
  %v379 = vld [vmem:[%s376 + $0x8] sm:$0xf]
  %v380 = vld [vmem:[%s376 + $0xc] sm:$0xf]
  %v381 = vld [vmem:[%s376 + $0x10] sm:$0xf]
  %v382 = vld [vmem:[%s376 + $0x14] sm:$0xf]
  %v383 = vld [vmem:[%s376 + $0x18] sm:$0xf]
  %v384 = vld [vmem:[%s376 + $0x1c] sm:$0xf]
  %v385 = vld [vmem:[%s376 + $0x20] sm:$0xf]
  %v386 = vld [vmem:[%s376 + $0x24] sm:$0xf]
  %v387 = vld [vmem:[%s376 + $0x28] sm:$0xf]
  %v388 = vld [vmem:[%s376 + $0x2c] sm:$0xf]
  %v389 = vld [vmem:[%s376 + $0x30] sm:$0xf]
  %v390 = vld [vmem:[%s376 + $0x34] sm:$0xf]
  %v391 = vld [vmem:[%s376 + $0x38] sm:$0xf]
  %v392 = vld [vmem:[%s376 + $0x3c] sm:$0xf]
  %v393 = vld [vmem:[%s376 + $0x40] sm:$0xf]
  %v394 = vld [vmem:[%s376 + $0x44] sm:$0xf]
  %v395 = vld [vmem:[%s376 + $0x48] sm:$0xf]
  %v396 = vld [vmem:[%s376 + $0x4c] sm:$0xf]
  %v397 = vld [vmem:[%s376 + $0x50] sm:$0xf]
  %v398 = vld [vmem:[%s376 + $0x54] sm:$0xf]
  %v399 = vld [vmem:[%s376 + $0x58] sm:$0xf]
  %v400 = vld [vmem:[%s376 + $0x5c] sm:$0xf]
  %v401 = vld [vmem:[%s376 + $0x60] sm:$0xf]
  %v402 = vld [vmem:[%s376 + $0x64] sm:$0xf]
  %v403 = vld [vmem:[%s376 + $0x68] sm:$0xf]
  %v404 = vld [vmem:[%s376 + $0x6c] sm:$0xf]
  %v405 = vld [vmem:[%s376 + $0x70] sm:$0xf]
  %v406 = vld [vmem:[%s376 + $0x74] sm:$0xf]
  %v407 = vld [vmem:[%s376 + $0x78] sm:$0xf]
  %v408 = vld [vmem:[%s376 + $0x7c] sm:$0x1]
  %v441 = vunpack.c.l.b16 %v377
  %v442 = vunpack.c.l.b16 %v378
  %v443 = vunpack.c.l.b16 %v379
  %v444 = vunpack.c.l.b16 %v380
  %v445 = vunpack.c.l.b16 %v381
  %v446 = vunpack.c.l.b16 %v382
  %v447 = vunpack.c.l.b16 %v383
  %v448 = vunpack.c.l.b16 %v384
  %v449 = vunpack.c.l.b16 %v385
  %v450 = vunpack.c.l.b16 %v386
  %v451 = vunpack.c.l.b16 %v387
  %v452 = vunpack.c.l.b16 %v388
  %v453 = vunpack.c.l.b16 %v389
  %v454 = vunpack.c.l.b16 %v390
  %v455 = vunpack.c.l.b16 %v391
  %v456 = vunpack.c.l.b16 %v392
  %v457 = vunpack.c.l.b16 %v393
  %v458 = vunpack.c.l.b16 %v394
  %v459 = vunpack.c.l.b16 %v395
  %v460 = vunpack.c.l.b16 %v396
  %v461 = vunpack.c.l.b16 %v397
  %v462 = vunpack.c.l.b16 %v398
  %v463 = vunpack.c.l.b16 %v399
  %v464 = vunpack.c.l.b16 %v400
  %v465 = vunpack.c.l.b16 %v401
  %v466 = vunpack.c.l.b16 %v402
  %v467 = vunpack.c.l.b16 %v403
  %v468 = vunpack.c.l.b16 %v404
  %v469 = vunpack.c.l.b16 %v405
  %v470 = vunpack.c.l.b16 %v406
  %v471 = vunpack.c.l.b16 %v407
  %v472 = vunpack.c.l.b16 %v408
  %v473 = vpack.c.b16 %v442, %v441
  %v474 = vpack.c.b16 %v444, %v443
  %v475 = vpack.c.b16 %v446, %v445
  %v476 = vpack.c.b16 %v448, %v447
  %v477 = vpack.c.b16 %v450, %v449
  %v478 = vpack.c.b16 %v452, %v451
  %v479 = vpack.c.b16 %v454, %v453
  %v480 = vpack.c.b16 %v456, %v455
  %v481 = vpack.c.b16 %v458, %v457
  %v482 = vpack.c.b16 %v460, %v459
  %v483 = vpack.c.b16 %v462, %v461
  %v484 = vpack.c.b16 %v464, %v463
  %v485 = vpack.c.b16 %v466, %v465
  %v486 = vpack.c.b16 %v468, %v467
  %v487 = vpack.c.b16 %v470, %v469
  %v488 = vpack.c.b16 %v472, %v471
  %v505 = vsel %vm157, %v488, 0
  %507 = vmatprep.subr.bf16.mxu0 0
  %508 = vmatpush1.bf16.msra.mxu0 %v473
  %509 = vmatprep.subr.bf16.mxu0 0
  %510 = vmatpush1.bf16.msra.mxu0 %v474
  %511 = vmatprep.subr.bf16.mxu0 0
  %512 = vmatpush1.bf16.msra.mxu0 %v475
  %513 = vmatprep.subr.bf16.mxu0 0
  %514 = vmatpush1.bf16.msra.mxu0 %v476
  %515 = vmatprep.subr.bf16.mxu0 0
  %516 = vmatpush1.bf16.msra.mxu0 %v477
  %517 = vmatprep.subr.bf16.mxu0 0
  %518 = vmatpush1.bf16.msra.mxu0 %v478
  %519 = vmatprep.subr.bf16.mxu0 0
  %520 = vmatpush1.bf16.msra.mxu0 %v479
  %521 = vmatprep.subr.bf16.mxu0 0
  %522 = vmatpush1.bf16.msra.mxu0 %v480
  %523 = vmatprep.subr.bf16.mxu0 0
  %524 = vmatpush1.bf16.msra.mxu0 %v481
  %525 = vmatprep.subr.bf16.mxu0 0
  %526 = vmatpush1.bf16.msra.mxu0 %v482
  %527 = vmatprep.subr.bf16.mxu0 0
  %528 = vmatpush1.bf16.msra.mxu0 %v483
  %529 = vmatprep.subr.bf16.mxu0 0
  %530 = vmatpush1.bf16.msra.mxu0 %v484
  %531 = vmatprep.subr.bf16.mxu0 0
  %532 = vmatpush1.bf16.msra.mxu0 %v485
  %533 = vmatprep.subr.bf16.mxu0 0
  %534 = vmatpush1.bf16.msra.mxu0 %v486
  %535 = vmatprep.subr.bf16.mxu0 0
  %536 = vmatpush1.bf16.msra.mxu0 %v487
  %537 = vmatprep.subr.bf16.mxu0 0
  %538 = vmatpush1.bf16.msra.mxu0 %v505
  %539 = vmatprep.mubr.bf16.mxu0 %v155
  %540 = vmatmul.mubr.bf16.gmra.mrb[0].mxu0 %v55
  %v541 = vpop.f32.mrb[0].mxu0
  %v542 = vadd.f32 0.0, %v541
  %v543 = vpop.f32.mrb[0].mxu0
  %v544 = vpop.f32.mrb[0].mxu0
  %v545 = vadd.f32 0.0, %v544
  %v546 = vpop.f32.mrb[0].mxu0
  %547 = vdwg.mxu0
  %v548 = vmax.f32 %v374, %v542
  %v549 = vmax.f32 %v375, %v545
  %s550 = scalar_lea.vmem %s0, 384
  %v551 = vld [vmem:[%s550] sm:$0xf]
  %v552 = vld [vmem:[%s550 + $0x4] sm:$0xf]
  %v553 = vld [vmem:[%s550 + $0x8] sm:$0xf]
  %v554 = vld [vmem:[%s550 + $0xc] sm:$0xf]
  %v555 = vld [vmem:[%s550 + $0x10] sm:$0xf]
  %v556 = vld [vmem:[%s550 + $0x14] sm:$0xf]
  %v557 = vld [vmem:[%s550 + $0x18] sm:$0xf]
  %v558 = vld [vmem:[%s550 + $0x1c] sm:$0xf]
  %v559 = vld [vmem:[%s550 + $0x20] sm:$0xf]
  %v560 = vld [vmem:[%s550 + $0x24] sm:$0xf]
  %v561 = vld [vmem:[%s550 + $0x28] sm:$0xf]
  %v562 = vld [vmem:[%s550 + $0x2c] sm:$0xf]
  %v563 = vld [vmem:[%s550 + $0x30] sm:$0xf]
  %v564 = vld [vmem:[%s550 + $0x34] sm:$0xf]
  %v565 = vld [vmem:[%s550 + $0x38] sm:$0xf]
  %v566 = vld [vmem:[%s550 + $0x3c] sm:$0xf]
  %v567 = vld [vmem:[%s550 + $0x40] sm:$0xf]
  %v568 = vld [vmem:[%s550 + $0x44] sm:$0xf]
  %v569 = vld [vmem:[%s550 + $0x48] sm:$0xf]
  %v570 = vld [vmem:[%s550 + $0x4c] sm:$0xf]
  %v571 = vld [vmem:[%s550 + $0x50] sm:$0xf]
  %v572 = vld [vmem:[%s550 + $0x54] sm:$0xf]
  %v573 = vld [vmem:[%s550 + $0x58] sm:$0xf]
  %v574 = vld [vmem:[%s550 + $0x5c] sm:$0xf]
  %v575 = vld [vmem:[%s550 + $0x60] sm:$0xf]
  %v576 = vld [vmem:[%s550 + $0x64] sm:$0xf]
  %v577 = vld [vmem:[%s550 + $0x68] sm:$0xf]
  %v578 = vld [vmem:[%s550 + $0x6c] sm:$0xf]
  %v579 = vld [vmem:[%s550 + $0x70] sm:$0xf]
  %v580 = vld [vmem:[%s550 + $0x74] sm:$0xf]
  %v581 = vld [vmem:[%s550 + $0x78] sm:$0xf]
  %v582 = vld [vmem:[%s550 + $0x7c] sm:$0x1]
  %v615 = vunpack.c.l.b16 %v551
  %v616 = vunpack.c.l.b16 %v552
  %v617 = vunpack.c.l.b16 %v553
  %v618 = vunpack.c.l.b16 %v554
  %v619 = vunpack.c.l.b16 %v555
  %v620 = vunpack.c.l.b16 %v556
  %v621 = vunpack.c.l.b16 %v557
  %v622 = vunpack.c.l.b16 %v558
  %v623 = vunpack.c.l.b16 %v559
  %v624 = vunpack.c.l.b16 %v560
  %v625 = vunpack.c.l.b16 %v561
  %v626 = vunpack.c.l.b16 %v562
  %v627 = vunpack.c.l.b16 %v563
  %v628 = vunpack.c.l.b16 %v564
  %v629 = vunpack.c.l.b16 %v565
  %v630 = vunpack.c.l.b16 %v566
  %v631 = vunpack.c.l.b16 %v567
  %v632 = vunpack.c.l.b16 %v568
  %v633 = vunpack.c.l.b16 %v569
  %v634 = vunpack.c.l.b16 %v570
  %v635 = vunpack.c.l.b16 %v571
  %v636 = vunpack.c.l.b16 %v572
  %v637 = vunpack.c.l.b16 %v573
  %v638 = vunpack.c.l.b16 %v574
  %v639 = vunpack.c.l.b16 %v575
  %v640 = vunpack.c.l.b16 %v576
  %v641 = vunpack.c.l.b16 %v577
  %v642 = vunpack.c.l.b16 %v578
  %v643 = vunpack.c.l.b16 %v579
  %v644 = vunpack.c.l.b16 %v580
  %v645 = vunpack.c.l.b16 %v581
  %v646 = vunpack.c.l.b16 %v582
  %v647 = vpack.c.b16 %v616, %v615
  %v648 = vpack.c.b16 %v618, %v617
  %v649 = vpack.c.b16 %v620, %v619
  %v650 = vpack.c.b16 %v622, %v621
  %v651 = vpack.c.b16 %v624, %v623
  %v652 = vpack.c.b16 %v626, %v625
  %v653 = vpack.c.b16 %v628, %v627
  %v654 = vpack.c.b16 %v630, %v629
  %v655 = vpack.c.b16 %v632, %v631
  %v656 = vpack.c.b16 %v634, %v633
  %v657 = vpack.c.b16 %v636, %v635
  %v658 = vpack.c.b16 %v638, %v637
  %v659 = vpack.c.b16 %v640, %v639
  %v660 = vpack.c.b16 %v642, %v641
  %v661 = vpack.c.b16 %v644, %v643
  %v662 = vpack.c.b16 %v646, %v645
  %v679 = vsel %vm157, %v662, 0
  %681 = vmatprep.subr.bf16.mxu0 0
  %682 = vmatpush1.bf16.msra.mxu0 %v647
  %683 = vmatprep.subr.bf16.mxu0 0
  %684 = vmatpush1.bf16.msra.mxu0 %v648
  %685 = vmatprep.subr.bf16.mxu0 0
  %686 = vmatpush1.bf16.msra.mxu0 %v649
  %687 = vmatprep.subr.bf16.mxu0 0
  %688 = vmatpush1.bf16.msra.mxu0 %v650
  %689 = vmatprep.subr.bf16.mxu0 0
  %690 = vmatpush1.bf16.msra.mxu0 %v651
  %691 = vmatprep.subr.bf16.mxu0 0
  %692 = vmatpush1.bf16.msra.mxu0 %v652
  %693 = vmatprep.subr.bf16.mxu0 0
  %694 = vmatpush1.bf16.msra.mxu0 %v653
  %695 = vmatprep.subr.bf16.mxu0 0
  %696 = vmatpush1.bf16.msra.mxu0 %v654
  %697 = vmatprep.subr.bf16.mxu0 0
  %698 = vmatpush1.bf16.msra.mxu0 %v655
  %699 = vmatprep.subr.bf16.mxu0 0
  %700 = vmatpush1.bf16.msra.mxu0 %v656
  %701 = vmatprep.subr.bf16.mxu0 0
  %702 = vmatpush1.bf16.msra.mxu0 %v657
  %703 = vmatprep.subr.bf16.mxu0 0
  %704 = vmatpush1.bf16.msra.mxu0 %v658
  %705 = vmatprep.subr.bf16.mxu0 0
  %706 = vmatpush1.bf16.msra.mxu0 %v659
  %707 = vmatprep.subr.bf16.mxu0 0
  %708 = vmatpush1.bf16.msra.mxu0 %v660
  %709 = vmatprep.subr.bf16.mxu0 0
  %710 = vmatpush1.bf16.msra.mxu0 %v661
  %711 = vmatprep.subr.bf16.mxu0 0
  %712 = vmatpush1.bf16.msra.mxu0 %v679
  %713 = vmatprep.mubr.bf16.mxu0 %v155
  %714 = vmatmul.mubr.bf16.gmra.mrb[0].mxu0 %v55
  %v715 = vpop.f32.mrb[0].mxu0
  %v716 = vadd.f32 0.0, %v715
  %v717 = vpop.f32.mrb[0].mxu0
  %v718 = vpop.f32.mrb[0].mxu0
  %v719 = vadd.f32 0.0, %v718
  %v720 = vpop.f32.mrb[0].mxu0
  %721 = vdwg.mxu0
  %v722 = vmax.f32 %v548, %v716
  %v723 = vmax.f32 %v549, %v719
  %v724 = vld [vmem:[%s2] sm:$0xff]
  %v725 = vld [vmem:[%s2 + $0x8] sm:$0x3]
  %727 = vset.pattern.permute.xlu0 0
  %728 = vperm.xlu0 %727, %v724
  %v729 = vpop.permute.xlu0 %728
  %732 = vset.pattern.permute.xlu0 0
  %733 = vperm.xlu0 %732, %v725
  %v734 = vpop.permute.xlu0 %733
  %v736 = vadd.f32 %v722, %v729
  %v737 = vadd.f32 %v723, %v734
  %v738 = vtanh.pop %v736
  %v739 = vtanh.pop %v737
  %vm740 = vcmask 261120
  %741 = vst.msk [vmem:[%s3] sm:$0xff] %vm740, %v738
  %vm742 = vcmask 254976
  %743 = vst.msk [vmem:[%s3 + $0x8] sm:$0x3] %vm742, %v739
  // Predicated region
  $region14: #{cnn_forward.4} parent=0 // pred_check
    _
  $region15: #{cnn_forward.4} parent=0 // pred_check_branch
    %745 = sbr.rel (0) target = $region17
  $region16: #{cnn_forward.4} parent=0 // pred_region
    _
  $region17: #{cnn_forward.4} parent=0 // pred_fallthru
    _
  // Predicated region
  $region18: #{cnn_forward.4} parent=0 // pred_check
    _
  $region19: #{cnn_forward.4} parent=0 // pred_check_branch
    %747 = sbr.rel (0) target = $region21
  $region20: #{cnn_forward.4} parent=0 // pred_region
    _
  $region21: #{cnn_forward.4} parent=0 // pred_fallthru
    _

// kernel: cnn_forward.5
$region0: #{cnn_forward.5}
  #allocation0 [shape = 'u32[]', space=smem, size = 0x4, offset = 0x4, fixed_abs, tag = 'smem constant byte address 0x4 - core index']
  #allocation1 [shape = 'u32[144,128]{1,0:T(1,128)}', space=vmem, size = 0x12000, scoped, tag = 'internal scratch']
  %s0 = inlined_call_operand.vmem [shape: f32[2,160], index: 0, kind: input, shape index: {}]
  %s1 = inlined_call_operand.vmem [shape: f32[160,50], index: 1, kind: input, shape index: {}]
  %s2 = inlined_call_operand.vmem [shape: f32[1,50], index: 2, kind: input, shape index: {}]
  %s3 = inlined_call_operand.vmem [shape: f32[50,10], index: 3, kind: input, shape index: {}]
  %s4 = inlined_call_operand.vmem [shape: f32[1,10], index: 4, kind: input, shape index: {}]
  %s5 = inlined_call_operand.hbm [shape: f32[2,10], index: 5, kind: output, shape index: {}]
  %s6 = sld [smem:[#allocation0]]
  $region30: #{cnn_forward.5} parent=0
    _
  %s8 = ssub.s32 1, %s6
  %s9 = scalar_select 0, %s8, %s6
  $region1: #{cnn_forward.5} parent=0
    #allocation2 [shape = 'u8[1024]{0}', space=vmem, size = 0x400, scoped, tag = 'output window, operand 0, single buffered']
    #allocation3 [shape = 's32[1]{0}', space=sflag, size = 0x4, scoped, tag = 'scoped memory for cnn_forward.5']
    %10 = vsyncpa [#allocation3], 0
    // Predicated region
    $region2: #{cnn_forward.5} parent=1 // pred_check
      _
    $region3: #{cnn_forward.5} parent=1 // pred_check_branch
      %12 = sbr.rel (0) target = $region5
    $region4: #{cnn_forward.5} parent=1 // pred_region
      _
    $region5: #{cnn_forward.5} parent=1 // pred_fallthru
      _
    // Predicated region
    $region6: #{cnn_forward.5} parent=1 // pred_check
      _
    $region7: #{cnn_forward.5} parent=1 // pred_check_branch
      %14 = sbr.rel (0) target = $region9
    $region8: #{cnn_forward.5} parent=1 // pred_region
      _
    $region9: #{cnn_forward.5} parent=1 // pred_fallthru
      _
    // Predicated region
    $region10: #{cnn_forward.5} parent=1 // pred_check
      _
    $region11: #{cnn_forward.5} parent=1 // pred_check_branch
      %16 = sbr.rel (0) target = $region13
    $region12: #{cnn_forward.5} parent=1 // pred_region
      _
    $region13: #{cnn_forward.5} parent=1 // pred_fallthru
      _
    // Predicated region
    $region14: #{cnn_forward.5} parent=1 // pred_check
      _
    $region15: #{cnn_forward.5} parent=1 // pred_check_branch
      %18 = sbr.rel (0) target = $region17
    $region16: #{cnn_forward.5} parent=1 // pred_region
      _
    $region17: #{cnn_forward.5} parent=1 // pred_fallthru
      _
    // Predicated region
    $region18: #{cnn_forward.5} parent=1 // pred_check
      _
    $region19: #{cnn_forward.5} parent=1 // pred_check_branch
      %20 = sbr.rel (0) target = $region21
    $region20: #{cnn_forward.5} parent=1 // pred_region
      _
    $region21: #{cnn_forward.5} parent=1 // pred_fallthru
      _
    %v21 = vld [vmem:[%s0] sm:$0xf]
    %v22 = vld [vmem:[%s1] sm:$0xff]
    %v23 = vld [vmem:[%s1 + $0x8] sm:$0xff]
    %v24 = vld [vmem:[%s1 + $0x10] sm:$0xff]
    %v25 = vld [vmem:[%s1 + $0x18] sm:$0xff]
    %v26 = vld [vmem:[%s1 + $0x20] sm:$0xff]
    %v27 = vld [vmem:[%s1 + $0x28] sm:$0xff]
    %v28 = vld [vmem:[%s1 + $0x30] sm:$0xff]
    %v29 = vld [vmem:[%s1 + $0x38] sm:$0xff]
    %v30 = vld [vmem:[%s1 + $0x40] sm:$0xff]
    %v31 = vld [vmem:[%s1 + $0x48] sm:$0xff]
    %v32 = vld [vmem:[%s1 + $0x50] sm:$0xff]
    %v33 = vld [vmem:[%s1 + $0x58] sm:$0xff]
    %v34 = vld [vmem:[%s1 + $0x60] sm:$0xff]
    %v35 = vld [vmem:[%s1 + $0x68] sm:$0xff]
    %v36 = vld [vmem:[%s1 + $0x70] sm:$0xff]
    %v37 = vld [vmem:[%s1 + $0x78] sm:$0xff]
    %v38 = vld [vmem:[%s1 + $0x80] sm:$0xff]
    %v39 = vld [vmem:[%s1 + $0x88] sm:$0xff]
    %v40 = vld [vmem:[%s1 + $0x90] sm:$0xff]
    %v41 = vld [vmem:[%s1 + $0x98] sm:$0xff]
    %v42 = vld [vmem:[%s2] sm:$0x1]
    %v44 = vlaneseq
    %v45 = vshrl.u32 %v44, 7
    %v46 = vsub.s32 0, %v45
    %v47 = vrot.slane %v42, %v46
    %v51 = vunpack.c.l.s4 1983009808
    %v52 = vunpack.c.0.s8 %v51
    %v53 = vlaneseq
    %v54 = vshrl.u32 %v53, 7
    %v55 = vsub.s32 %v52, %v54
    %v56 = vrot.slane %v21, %v55
    %v57 = vcombine.high %v56, %v56
    %vm59 = vcmask 261120
    %v60 = vsel %vm59, %v57, 0
    %62 = vmatprep.subr.mxu0 0.0
    %63 = vmatpush1.msra.mxu0 %v22
    %64 = vmatprep.subr.mxu0 0.0
    %65 = vmatpush1.msra.mxu0 %v23
    %66 = vmatprep.subr.mxu0 0.0
    %67 = vmatpush1.msra.mxu0 %v24
    %68 = vmatprep.subr.mxu0 0.0
    %69 = vmatpush1.msra.mxu0 %v25
    %70 = vmatprep.subr.mxu0 0.0
    %71 = vmatpush1.msra.mxu0 %v26
    %72 = vmatprep.subr.mxu0 0.0
    %73 = vmatpush1.msra.mxu0 %v27
    %74 = vmatprep.subr.mxu0 0.0
    %75 = vmatpush1.msra.mxu0 %v28
    %76 = vmatprep.subr.mxu0 0.0
    %77 = vmatpush1.msra.mxu0 %v29
    %78 = vmatprep.subr.mxu0 0.0
    %79 = vmatpush1.msra.mxu0 %v30
    %80 = vmatprep.subr.mxu0 0.0
    %81 = vmatpush1.msra.mxu0 %v31
    %82 = vmatprep.subr.mxu0 0.0
    %83 = vmatpush1.msra.mxu0 %v32
    %84 = vmatprep.subr.mxu0 0.0
    %85 = vmatpush1.msra.mxu0 %v33
    %86 = vmatprep.subr.mxu0 0.0
    %87 = vmatpush1.msra.mxu0 %v34
    %88 = vmatprep.subr.mxu0 0.0
    %89 = vmatpush1.msra.mxu0 %v35
    %90 = vmatprep.subr.mxu0 0.0
    %91 = vmatpush1.msra.mxu0 %v36
    %92 = vmatprep.subr.mxu0 0.0
    %93 = vmatpush1.msra.mxu0 %v37
    %94 = vmatprep.subr.mxu0 0.0
    %95 = vmatpush1.msra.mxu0 %v38
    %96 = vmatprep.subr.mxu0 0.0
    %97 = vmatpush1.msra.mxu0 %v39
    %98 = vmatprep.subr.mxu0 0.0
    %99 = vmatpush1.msra.mxu0 %v40
    %100 = vmatprep.subr.mxu0 0.0
    %101 = vmatpush1.msra.mxu0 %v41
    %102 = vmatprep.subr.mxu0 0.0
    %103 = vmatpush1.msra.mxu0 0.0
    %104 = vmatprep.subr.mxu0 0.0
    %105 = vmatpush1.msra.mxu0 0.0
    %106 = vmatprep.subr.mxu0 0.0
    %107 = vmatpush1.msra.mxu0 0.0
    %108 = vmatprep.subr.mxu0 0.0
    %109 = vmatpush1.msra.mxu0 0.0
    %110 = vmatprep.subr.mxu0 0.0
    %111 = vmatpush1.msra.mxu0 0.0
    %112 = vmatprep.subr.mxu0 0.0
    %113 = vmatpush1.msra.mxu0 0.0
    %114 = vmatprep.subr.mxu0 0.0
    %115 = vmatpush1.msra.mxu0 0.0
    %116 = vmatprep.subr.mxu0 0.0
    %117 = vmatpush1.msra.mxu0 0.0
    %118 = vmatprep.subr.mxu0 0.0
    %119 = vmatpush1.msra.mxu0 0.0
    %120 = vmatprep.subr.mxu0 0.0
    %121 = vmatpush1.msra.mxu0 0.0
    %122 = vmatprep.subr.mxu0 0.0
    %123 = vmatpush1.msra.mxu0 0.0
    %124 = vmatprep.subr.mxu0 0.0
    %125 = vmatpush1.msra.mxu0 0.0
    %126 = vmatprep.mubr.f32.mxu0 %v60
    %127 = vmatmul.mubr.f32.gmra.mrb[0].mxu0 %v56
    %v128 = vpop.f32.mrb[0].mxu0
    %v129 = vadd.f32 %v47, %v128
    %v130 = vpop.f32.mrb[0].mxu0
    %131 = vdwg.mxu0
    %v132 = vtanh.pop %v129
    %v133 = vld [vmem:[%s3] sm:$0xff]
    %v134 = vld [vmem:[%s3 + $0x8] sm:$0xff]
    %v135 = vld [vmem:[%s3 + $0x10] sm:$0xff]
    %v136 = vld [vmem:[%s3 + $0x18] sm:$0xff]
    %v137 = vld [vmem:[%s3 + $0x20] sm:$0xff]
    %v138 = vld [vmem:[%s3 + $0x28] sm:$0xff]
    %v139 = vld [vmem:[%s3 + $0x30] sm:$0x3]
    %v140 = vld [vmem:[%s4] sm:$0x1]
    %v142 = vlaneseq
    %v143 = vshrl.u32 %v142, 7
    %v144 = vsub.s32 0, %v143
    %v145 = vrot.slane %v140, %v144
    %vm147 = vcmask 408576
    %v149 = vsel %vm147, %v132, 0
    %vm151 = vcmask 1041408
    %v153 = vsel %vm151, %v139, 0
    %155 = vmatprep.subr.mxu0 0.0
    %156 = vmatpush1.msra.mxu0 %v133
    %157 = vmatprep.subr.mxu0 0.0
    %158 = vmatpush1.msra.mxu0 %v134
    %159 = vmatprep.subr.mxu0 0.0
    %160 = vmatpush1.msra.mxu0 %v135
    %161 = vmatprep.subr.mxu0 0.0
    %162 = vmatpush1.msra.mxu0 %v136
    %163 = vmatprep.subr.mxu0 0.0
    %164 = vmatpush1.msra.mxu0 %v137
    %165 = vmatprep.subr.mxu0 0.0
    %166 = vmatpush1.msra.mxu0 %v138
    %167 = vmatprep.subr.mxu0 0.0
    %168 = vmatpush1.msra.mxu0 %v153
    %169 = vmatprep.subr.mxu0 0.0
    %170 = vmatpush1.msra.mxu0 0.0
    %171 = vmatprep.subr.mxu0 0.0
    %172 = vmatpush1.msra.mxu0 0.0
    %173 = vmatprep.subr.mxu0 0.0
    %174 = vmatpush1.msra.mxu0 0.0
    %175 = vmatprep.subr.mxu0 0.0
    %176 = vmatpush1.msra.mxu0 0.0
    %177 = vmatprep.subr.mxu0 0.0
    %178 = vmatpush1.msra.mxu0 0.0
    %179 = vmatprep.subr.mxu0 0.0
    %180 = vmatpush1.msra.mxu0 0.0
    %181 = vmatprep.subr.mxu0 0.0
    %182 = vmatpush1.msra.mxu0 0.0
    %183 = vmatprep.subr.mxu0 0.0
    %184 = vmatpush1.msra.mxu0 0.0
    %185 = vmatprep.subr.mxu0 0.0
    %186 = vmatpush1.msra.mxu0 0.0
    %187 = vmatprep.subr.mxu0 0.0
    %188 = vmatpush1.msra.mxu0 0.0
    %189 = vmatprep.subr.mxu0 0.0
    %190 = vmatpush1.msra.mxu0 0.0
    %191 = vmatprep.subr.mxu0 0.0
    %192 = vmatpush1.msra.mxu0 0.0
    %193 = vmatprep.subr.mxu0 0.0
    %194 = vmatpush1.msra.mxu0 0.0
    %195 = vmatprep.subr.mxu0 0.0
    %196 = vmatpush1.msra.mxu0 0.0
    %197 = vmatprep.subr.mxu0 0.0
    %198 = vmatpush1.msra.mxu0 0.0
    %199 = vmatprep.subr.mxu0 0.0
    %200 = vmatpush1.msra.mxu0 0.0
    %201 = vmatprep.subr.mxu0 0.0
    %202 = vmatpush1.msra.mxu0 0.0
    %203 = vmatprep.subr.mxu0 0.0
    %204 = vmatpush1.msra.mxu0 0.0
    %205 = vmatprep.subr.mxu0 0.0
    %206 = vmatpush1.msra.mxu0 0.0
    %207 = vmatprep.subr.mxu0 0.0
    %208 = vmatpush1.msra.mxu0 0.0
    %209 = vmatprep.subr.mxu0 0.0
    %210 = vmatpush1.msra.mxu0 0.0
    %211 = vmatprep.subr.mxu0 0.0
    %212 = vmatpush1.msra.mxu0 0.0
    %213 = vmatprep.subr.mxu0 0.0
    %214 = vmatpush1.msra.mxu0 0.0
    %215 = vmatprep.subr.mxu0 0.0
    %216 = vmatpush1.msra.mxu0 0.0
    %217 = vmatprep.subr.mxu0 0.0
    %218 = vmatpush1.msra.mxu0 0.0
    %219 = vmatprep.mubr.f32.mxu0 0.0
    %220 = vmatmul.mubr.f32.gmra.mrb[0].mxu0 %v149
    %v221 = vpop.f32.mrb[0].mxu0
    %v222 = vadd.f32 %v145, %v221
    %v223 = vpop.f32.mrb[0].mxu0
    %224 = vdwg.mxu0
    %vm225 = vcmask 74752
    %v226 = vsel %vm225, %v222, -inf
    %227 = vmax.xlane.f32.xlu0 %v226
    %v228 = vpop.xlane.xlu0 %227
    %v229 = vsub.f32 %v222, %v228
    %v230 = vmul.f32 %v229, 1.442695
    %v231 = vpow.pop %v230
    %v232 = vsel %vm225, %v231, 0.0
    %233 = vadd.xlane.f32.xlu0 %v232
    %v234 = vpop.xlane.xlu0 %233
    %v235 = vrcp.pop %v234
    %v236 = vmul.f32 %v231, %v235
    %v237 = vsel %vm225, %v236, -inf
    %238 = vmax.xlane.f32.xlu0 %v237
    %v239 = vpop.xlane.xlu0 %238
    %v240 = vsub.f32 %v236, %v239
    %v241 = vmul.f32 %v240, 1.442695
    %v242 = vpow.pop %v241
    %v243 = vsel %vm225, %v242, 0.0
    %244 = vadd.xlane.f32.xlu0 %v243
    %v245 = vpop.xlane.xlu0 %244
    %v246 = vrcp.pop %v245
    %v247 = vmul.f32 %v242, %v246
    %248 = vst.msk [vmem:[#allocation2] sm:$0x3] %vm225, %v247
    // Predicated region
    $region22: #{cnn_forward.5} parent=1 // pred_check
      _
    $region23: #{cnn_forward.5} parent=1 // pred_check_branch
      %250 = sbr.rel (0) target = $region25
    $region24: #{cnn_forward.5} parent=1 // pred_region
      %s252 = ssub.s32 32, 32
      %253 = vsyncadd [#allocation3], %s252
      %s255 = sshll.u32 [#allocation2], 4
      %s256 = int_to_ptr.vmem [resolvable:$true] %s255
      %258 = dma.vmem_to_hbm [thread:$0]  %s256, 32, %s5, [#allocation3]
    $region25: #{cnn_forward.5} parent=1 // pred_fallthru
      _
    // Predicated region
    $region26: #{cnn_forward.5} parent=1 // pred_check
      _
    $region27: #{cnn_forward.5} parent=1 // pred_check_branch
      %260 = sbr.rel (0) target = $region29
    $region28: #{cnn_forward.5} parent=1 // pred_region
      %261 = dma.done [#allocation3], 32
    $region29: #{cnn_forward.5} parent=1 // pred_fallthru
      _
    %262 = vsyncpa [#allocation3], 1

</llo_original>
